<compile_context>
chip_gen: v5e
topology: v5e:2x2
jax: 0.10.0
libtpu: 0.0.40
codegen_flags: <defaults>
</compile_context>

<pallas_src>
import jax
import jax.numpy as jnp
from jax import lax
from jax.experimental import pallas as pl
from jax.experimental.pallas import tpu as pltpu

N_SEGMENT = 8
LAM_KSIZE = 3    # LAM temporal kernel size (k=3)
LAM_PAD = 1      # LAM temporal padding
ME_KSIZE = 3     # ME channel-conv kernel size (k=3, pad=1)
BN_EPS = 1e-5


# ------------------------------ fused kernel -------------------------------

def lamme_kernel(x_ref, wnet_ref, bnet_ref, wlam_ref, blam_ref,
                 w1t_ref, bnsc_ref, bnsh_ref, w2t_ref, bmeT_ref, o_ref):
    """Fused net(1x1 conv) + LAM + ME + gating for ONE batch sample.

    x_ref:    (T, Cin, HW)  channel-major slab of the NCHW input (HW in lanes).
    wnet_ref: (C, Cin)      `net` 1x1 conv weight.
    bnet_ref: (C, 1)        `net` bias (column).
    wlam_ref: (C, C)        LAM 1x1 conv weight.
    blam_ref: (C, 1)        LAM 1x1 conv bias (column).
    w1t_ref:  (T, 2T)       MLP Linear1 weight, transposed.
    bnsc/bnsh:(1, 2T)       folded BatchNorm scale / shift (eval mode).
    w2t_ref:  (2T, 3)       MLP Linear2 weight, transposed.
    bmeT_ref: (C, C)        ME banded channel-conv matrix, transposed.
    o_ref:    (T, C, HW)    gated output (maps straight onto NCHW).
    """
    t, cin, hw = x_ref.shape

    wnet = wnet_ref[...]                                     # (C, Cin)
    bnet = bnet_ref[...]                                     # (C, 1)

    # ---------------- stats phase: everything is (C, T)-sized ----------------
    # mean over HW of x; the 1x1 conv commutes with the mean, so this also
    # gives mean_hw(net(x)) with one tiny matmul (NT dot, flash-attn style).
    xmean_tc = jnp.mean(x_ref[...], axis=2)                  # (T, Cin)
    pooled0 = lax.dot_general(wnet, xmean_tc, (((1,), (1,)), ((), ())),
                              preferred_element_type=jnp.float32) + bnet  # (C, T)

    # LAM global context: x_g = Conv1d(C->C, k=1)(mean over T,H,W).
    m_c = jnp.mean(pooled0, axis=1, keepdims=True)           # (C, 1)
    xg = jnp.dot(wlam_ref[...], m_c,
                 preferred_element_type=jnp.float32) + blam_ref[...]     # (C, 1)
    pooled = pooled0 + xg                                    # (C, T) = mean_hw(new_x)

    # MLP -> softmax temporal-attention weights (per channel row).
    hid = jnp.dot(pooled, w1t_ref[...], preferred_element_type=jnp.float32)  # (C, 2T)
    hid = jnp.maximum(hid * bnsc_ref[...] + bnsh_ref[...], 0.0)
    logits = jnp.dot(hid, w2t_ref[...], preferred_element_type=jnp.float32)  # (C, 3)
    l0, l1, l2 = logits[:, 0:1], logits[:, 1:2], logits[:, 2:3]
    mx = jnp.maximum(jnp.maximum(l0, l1), l2)
    e0, e1, e2 = jnp.exp(l0 - mx), jnp.exp(l1 - mx), jnp.exp(l2 - mx)
    inv = pl.reciprocal(e0 + e1 + e2, approx=True)           # EUP slot (free here)
    g0, g1, g2 = e0 * inv, e1 * inv, e2 * inv                # (C, 1) softmax weights

    # ME sigmoid attention straight from pooled stats: the HW-mean commutes
    # with the temporal conv and the temporal diff, so the full LAM/diff slabs
    # are never needed for it.
    zcol = jnp.zeros_like(pooled[:, 0:1])                    # (C, 1)
    prev_p = jnp.concatenate([zcol, pooled[:, :-1]], axis=1)
    next_p = jnp.concatenate([pooled[:, 1:], zcol], axis=1)
    lam_p = prev_p * g0 + pooled * g1 + next_p * g2          # (C, T) = mean_hw(lam)
    y = jnp.concatenate([lam_p[:, 1:] - lam_p[:, :-1], zcol], axis=1)     # (C, T)
    z = jnp.dot(bmeT_ref[...], y, preferred_element_type=jnp.float32)     # (C, T)
    att = 1.0 / (1.0 + jnp.exp(-z))                          # sigmoid

    # -------- apply phase: stream one time step, rolling 3-slice window --------
    def new_x(ti):   # `net` 1x1 conv + global-context add for frame ti, (C, HW)
        return (jnp.dot(wnet, x_ref[ti], preferred_element_type=jnp.float32)
                + bnet + xg)

    nx_prev = None
    nx_cur = new_x(0)
    for ti in range(t):                                      # static unroll, T small
        nx_next = new_x(ti + 1) if (ti + 1 < t) else None
        lam_t = nx_cur * g1                                  # depthwise temporal conv
        if nx_prev is not None:
            lam_t = lam_t + nx_prev * g0
        if nx_next is not None:
            lam_t = lam_t + nx_next * g2
        # gate + lane-dense (C, HW) store, directly in NCHW order
        o_ref[ti] = lam_t * att[:, ti:ti + 1]
        nx_prev, nx_cur = nx_cur, nx_next


# ------------------------------ wrapper ------------------------------------

def lamme_forward(x, params, n_segment=N_SEGMENT):
    nt, cin, h, w = x.shape
    t = n_segment
    nb = nt // t
    hw = h * w
    cout = params['w_net'].shape[0]
    two_t = 2 * t

    # Zero-copy channel-major view of the NCHW input; the kernel output
    # (NB, T, Cout, HW) reshapes (zero-copy) back to NCHW, so there is no
    # XLA layout pass on either side of the pallas_call.
    x4 = x.reshape(nb, t, cin, hw)

    # ---- tiny host-side precomputation (done once per call) ----
    bn_scale = (params['bn_gamma'] *
                lax.rsqrt(params['bn_var'] + BN_EPS)).reshape(1, two_t)
    bn_shift = (params['bn_beta'].reshape(1, two_t)
                - params['bn_mean'].reshape(1, two_t) * bn_scale)
    cidx = jnp.arange(cout)
    delta = cidx[None, :] - cidx[:, None]                    # c_out - c_in
    b_me = (params['w_me'][0] * (delta == 1)
            + params['w_me'][1] * (delta == 0)
            + params['w_me'][2] * (delta == -1)).astype(jnp.float32)

    # VMEM budget: double-buffered in/out blocks + ~5 live (C, HW) slices.
    in_blk = 4 * t * cin * hw
    out_blk = 4 * t * cout * hw
    footprint = 2 * in_blk + 2 * out_blk + 5 * 4 * cout * hw + (1 << 20)
    vmem_limit = int(min(max(2 * footprint, 32 << 20), 48 << 20))

    out4 = pl.pallas_call(
        lamme_kernel,
        out_shape=jax.ShapeDtypeStruct((nb, t, cout, hw), jnp.float32),
        grid=(nb,),
        in_specs=[
            pl.BlockSpec((None, t, cin, hw), lambda b: (b, 0, 0, 0)),   # x slab
            pl.BlockSpec((cout, cin), lambda b: (0, 0)),                # w_net
            pl.BlockSpec((cout, 1), lambda b: (0, 0)),                  # b_net
            pl.BlockSpec((cout, cout), lambda b: (0, 0)),               # w_lam_conv
            pl.BlockSpec((cout, 1), lambda b: (0, 0)),                  # b_lam_conv
            pl.BlockSpec((t, two_t), lambda b: (0, 0)),                 # W1^T
            pl.BlockSpec((1, two_t), lambda b: (0, 0)),                 # BN scale
            pl.BlockSpec((1, two_t), lambda b: (0, 0)),                 # BN shift
            pl.BlockSpec((two_t, LAM_KSIZE), lambda b: (0, 0)),         # W2^T
            pl.BlockSpec((cout, cout), lambda b: (0, 0)),               # ME band^T
        ],
        out_specs=pl.BlockSpec((None, t, cout, hw), lambda b: (b, 0, 0, 0)),
        compiler_params=pltpu.CompilerParams(
            dimension_semantics=("parallel",),
            vmem_limit_bytes=vmem_limit),
    )(x4, params['w_net'], params['b_net'].reshape(cout, 1),
      params['w_lam_conv'], params['b_lam_conv'].reshape(cout, 1),
      params['w_mlp1'].T, bn_scale, bn_shift, params['w_mlp2'].T, b_me.T)

    return out4.reshape(nt, cout, h, w)


# ------------------------- pure-JAX reference ------------------------------

def lamme_reference(x, p, n_segment=N_SEGMENT):
    nt, cin, h, w = x.shape
    t = n_segment
    nb = nt // t
    out = jnp.einsum('nihw,oi->nohw', x, p['w_net']) + p['b_net'][None, :, None, None]
    c = out.shape[1]
    new_x = jnp.transpose(out.reshape(nb, t, c, h, w), (0, 2, 1, 3, 4))   # (nb,c,t,h,w)
    x_g = jnp.mean(new_x, axis=(2, 3, 4)) @ p['w_lam_conv'].T + p['b_lam_conv']
    new_x = new_x + x_g[:, :, None, None, None]
    pooled = jnp.mean(new_x, axis=(3, 4)).reshape(nb * c, t)
    hm = pooled @ p['w_mlp1'].T
    hm = (hm - p['bn_mean']) / jnp.sqrt(p['bn_var'] + BN_EPS) * p['bn_gamma'] + p['bn_beta']
    hm = jnp.maximum(hm, 0.0)
    wgt = jax.nn.softmax(hm @ p['w_mlp2'].T, axis=-1)                     # (nbc, 3)
    xx = new_x.reshape(nb * c, t, h * w)
    xpad = jnp.pad(xx, ((0, 0), (LAM_PAD, LAM_PAD), (0, 0)))
    lam = sum(wgt[:, k][:, None, None] * xpad[:, k:k + t, :] for k in range(LAM_KSIZE))
    lam_nchw = jnp.transpose(lam.reshape(nb, c, t, h, w), (0, 2, 1, 3, 4)).reshape(nt, c, h, w)
    xs = lam_nchw.reshape(nb, t, c, h, w)
    diff = jnp.pad(xs[:, 1:] - xs[:, :-1], ((0, 0), (0, 1), (0, 0), (0, 0), (0, 0)))
    y = jnp.mean(diff.reshape(nt, c, h * w), axis=-1)                      # (nt, c)
    ypad = jnp.pad(y, ((0, 0), (1, 1)))
    z = sum(p['w_me'][k] * ypad[:, k:k + c] for k in range(ME_KSIZE))
    att = jax.nn.sigmoid(z)
    return att[:, :, None, None] * lam_nchw


# ------------------------------- params ------------------------------------

def init_params(key, cin, cout, t):
    ks = jax.random.split(key, 11)
    s = 0.1
    return {
        'w_net': s * jax.random.normal(ks[0], (cout, cin), jnp.float32),
        'b_net': s * jax.random.normal(ks[1], (cout,), jnp.float32),
        'w_lam_conv': s * jax.random.normal(ks[2], (cout, cout), jnp.float32),
        'b_lam_conv': s * jax.random.normal(ks[3], (cout,), jnp.float32),
        'w_mlp1': s * jax.random.normal(ks[4], (2 * t, t), jnp.float32),
        'w_mlp2': s * jax.random.normal(ks[5], (LAM_KSIZE, 2 * t), jnp.float32),
        'bn_gamma': 1.0 + s * jax.random.normal(ks[6], (2 * t,), jnp.float32),
        'bn_beta': s * jax.random.normal(ks[7], (2 * t,), jnp.float32),
        'bn_mean': s * jax.random.normal(ks[8], (2 * t,), jnp.float32),
        'bn_var': jax.random.uniform(ks[9], (2 * t,), jnp.float32, 0.5, 1.5),
        'w_me': s * jax.random.normal(ks[10], (ME_KSIZE,), jnp.float32),
    }


if __name__ == "__main__":
    key = jax.random.PRNGKey(0)
    kx, kp = jax.random.split(key)
    NB, T, CIN, COUT, H, W = 2, N_SEGMENT, 4, 16, 16, 16   # HW = 256 -> lane-dense
    NT = NB * T
    x = jax.random.normal(kx, (NT, CIN, H, W), jnp.float32)
    params = init_params(kp, CIN, COUT, T)

    out = jax.jit(lamme_forward)(x, params)
    out = jax.block_until_ready(out)
    assert out.shape == (NT, COUT, H, W)

    ref = lamme_reference(x, params)
    err = float(jnp.max(jnp.abs(out - ref)))
    if err < 1e-3:
        print("KERNEL_OK")
    else:
        print(f"MISMATCH max_abs_err={err}")
</pallas_src>

<mosaic_0001>
module attributes {stable_mosaic.version = 11 : i64} {
  func.func @lamme_kernel(%arg0: i32, %arg1: memref<1x8x4x256xf32, #tpu.memory_space<vmem>>, %arg2: memref<16x4xf32, #tpu.memory_space<vmem>>, %arg3: memref<16x1xf32, #tpu.memory_space<vmem>>, %arg4: memref<16x16xf32, #tpu.memory_space<vmem>>, %arg5: memref<16x1xf32, #tpu.memory_space<vmem>>, %arg6: memref<8x16xf32, #tpu.memory_space<vmem>>, %arg7: memref<1x16xf32, #tpu.memory_space<vmem>>, %arg8: memref<1x16xf32, #tpu.memory_space<vmem>>, %arg9: memref<16x3xf32, #tpu.memory_space<vmem>>, %arg10: memref<16x16xf32, #tpu.memory_space<vmem>>, %arg11: memref<1x8x16x256xf32, #tpu.memory_space<vmem>>) attributes {dimension_semantics = [#tpu.dimension_semantics<parallel>], iteration_bounds = array<i64: 2>, scalar_prefetch = 0 : i64, scratch_operands = 0 : i64, tpu.core_type = #tpu.core_type<tc>, window_params = [{transform_indices = @transform_0, window_bounds = array<i64: 1, 8, 4, 256>}, {pipeline_mode = #tpu.pipeline_mode<synchronous>, transform_indices = @transform_1, window_bounds = array<i64: 16, 4>}, {pipeline_mode = #tpu.pipeline_mode<synchronous>, transform_indices = @transform_2, window_bounds = array<i64: 16, 1>}, {pipeline_mode = #tpu.pipeline_mode<synchronous>, transform_indices = @transform_3, window_bounds = array<i64: 16, 16>}, {pipeline_mode = #tpu.pipeline_mode<synchronous>, transform_indices = @transform_4, window_bounds = array<i64: 16, 1>}, {pipeline_mode = #tpu.pipeline_mode<synchronous>, transform_indices = @transform_5, window_bounds = array<i64: 8, 16>}, {pipeline_mode = #tpu.pipeline_mode<synchronous>, transform_indices = @transform_6, window_bounds = array<i64: 1, 16>}, {pipeline_mode = #tpu.pipeline_mode<synchronous>, transform_indices = @transform_7, window_bounds = array<i64: 1, 16>}, {pipeline_mode = #tpu.pipeline_mode<synchronous>, transform_indices = @transform_8, window_bounds = array<i64: 16, 3>}, {pipeline_mode = #tpu.pipeline_mode<synchronous>, transform_indices = @transform_9, window_bounds = array<i64: 16, 16>}, {transform_indices = @transform_10, window_bounds = array<i64: 1, 8, 16, 256>}]} {
    %c0 = arith.constant 0 : index
    %c0_0 = arith.constant 0 : index
    %0 = vector.load %arg2[%c0, %c0_0] : memref<16x4xf32, #tpu.memory_space<vmem>>, vector<16x4xf32>
    %c0_1 = arith.constant 0 : index
    %c0_2 = arith.constant 0 : index
    %1 = vector.load %arg3[%c0_1, %c0_2] : memref<16x1xf32, #tpu.memory_space<vmem>>, vector<16x1xf32>
    %c0_3 = arith.constant 0 : index
    %c0_4 = arith.constant 0 : index
    %c0_5 = arith.constant 0 : index
    %c0_6 = arith.constant 0 : index
    %2 = vector.load %arg1[%c0_3, %c0_4, %c0_5, %c0_6] : memref<1x8x4x256xf32, #tpu.memory_space<vmem>>, vector<1x8x4x256xf32>
    %3 = vector.shape_cast %2 : vector<1x8x4x256xf32> to vector<8x4x256xf32>
    %cst = arith.constant dense<0.000000e+00> : vector<8x4xf32>
    %4 = vector.multi_reduction <add>, %3, %cst [2] : vector<8x4x256xf32> to vector<8x4xf32>
    %cst_7 = arith.constant 2.560000e+02 : f32
    %5 = vector.broadcast %cst_7 : f32 to vector<8x4xf32>
    %6 = arith.divf %4, %5 : vector<8x4xf32>
    %cst_8 = arith.constant dense<0.000000e+00> : vector<16x8xf32>
    %7 = tpu.matmul %0, %6, %cst_8 {dimension_numbers = #tpu.dot_dimension_numbers<[1], [1], [0], [0], [0, 0, 1, 0], [], []>} : vector<16x4xf32>, vector<8x4xf32>, vector<16x8xf32> -> vector<16x8xf32>
    %8 = vector.broadcast %1 : vector<16x1xf32> to vector<16x8xf32>
    %9 = arith.addf %7, %8 : vector<16x8xf32>
    %cst_9 = arith.constant dense<0.000000e+00> : vector<16xf32>
    %10 = vector.multi_reduction <add>, %9, %cst_9 [1] : vector<16x8xf32> to vector<16xf32>
    %11 = vector.shape_cast %10 : vector<16xf32> to vector<16x1xf32>
    %cst_10 = arith.constant 8.000000e+00 : f32
    %12 = vector.broadcast %cst_10 : f32 to vector<16x1xf32>
    %13 = arith.divf %11, %12 : vector<16x1xf32>
    %c0_11 = arith.constant 0 : index
    %c0_12 = arith.constant 0 : index
    %14 = vector.load %arg4[%c0_11, %c0_12] : memref<16x16xf32, #tpu.memory_space<vmem>>, vector<16x16xf32>
    %cst_13 = arith.constant dense<0.000000e+00> : vector<16x1xf32>
    %15 = tpu.matmul %14, %13, %cst_13 {dimension_numbers = #tpu.dot_dimension_numbers<[1], [0], [0], [1], [0, 0, 1, 1], [], []>} : vector<16x16xf32>, vector<16x1xf32>, vector<16x1xf32> -> vector<16x1xf32>
    %c0_14 = arith.constant 0 : index
    %c0_15 = arith.constant 0 : index
    %16 = vector.load %arg5[%c0_14, %c0_15] : memref<16x1xf32, #tpu.memory_space<vmem>>, vector<16x1xf32>
    %17 = arith.addf %15, %16 : vector<16x1xf32>
    %18 = vector.broadcast %17 : vector<16x1xf32> to vector<16x8xf32>
    %19 = arith.addf %9, %18 : vector<16x8xf32>
    %c0_16 = arith.constant 0 : index
    %c0_17 = arith.constant 0 : index
    %20 = vector.load %arg6[%c0_16, %c0_17] : memref<8x16xf32, #tpu.memory_space<vmem>>, vector<8x16xf32>
    %cst_18 = arith.constant dense<0.000000e+00> : vector<16x16xf32>
    %21 = tpu.matmul %19, %20, %cst_18 {dimension_numbers = #tpu.dot_dimension_numbers<[1], [0], [0], [1], [0, 0, 1, 1], [], []>} : vector<16x8xf32>, vector<8x16xf32>, vector<16x16xf32> -> vector<16x16xf32>
    %c0_19 = arith.constant 0 : index
    %c0_20 = arith.constant 0 : index
    %22 = vector.load %arg7[%c0_19, %c0_20] : memref<1x16xf32, #tpu.memory_space<vmem>>, vector<1x16xf32>
    %23 = vector.broadcast %22 : vector<1x16xf32> to vector<16x16xf32>
    %24 = arith.mulf %21, %23 : vector<16x16xf32>
    %c0_21 = arith.constant 0 : index
    %c0_22 = arith.constant 0 : index
    %25 = vector.load %arg8[%c0_21, %c0_22] : memref<1x16xf32, #tpu.memory_space<vmem>>, vector<1x16xf32>
    %26 = vector.broadcast %25 : vector<1x16xf32> to vector<16x16xf32>
    %27 = arith.addf %24, %26 : vector<16x16xf32>
    %cst_23 = arith.constant 0.000000e+00 : f32
    %28 = vector.broadcast %cst_23 : f32 to vector<16x16xf32>
    %29 = arith.maximumf %27, %28 : vector<16x16xf32>
    %c0_24 = arith.constant 0 : index
    %c0_25 = arith.constant 0 : index
    %30 = vector.load %arg9[%c0_24, %c0_25] : memref<16x3xf32, #tpu.memory_space<vmem>>, vector<16x3xf32>
    %cst_26 = arith.constant dense<0.000000e+00> : vector<16x3xf32>
    %31 = tpu.matmul %29, %30, %cst_26 {dimension_numbers = #tpu.dot_dimension_numbers<[1], [0], [0], [1], [0, 0, 1, 1], [], []>} : vector<16x16xf32>, vector<16x3xf32>, vector<16x3xf32> -> vector<16x3xf32>
    %32 = vector.extract_strided_slice %31 {offsets = [0, 0], sizes = [16, 1], strides = [1, 1]} : vector<16x3xf32> to vector<16x1xf32>
    %33 = vector.extract_strided_slice %31 {offsets = [0, 1], sizes = [16, 1], strides = [1, 1]} : vector<16x3xf32> to vector<16x1xf32>
    %34 = vector.extract_strided_slice %31 {offsets = [0, 2], sizes = [16, 1], strides = [1, 1]} : vector<16x3xf32> to vector<16x1xf32>
    %35 = arith.maximumf %32, %33 : vector<16x1xf32>
    %36 = arith.maximumf %35, %34 : vector<16x1xf32>
    %37 = arith.subf %32, %36 : vector<16x1xf32>
    %38 = math.exp %37 : vector<16x1xf32>
    %39 = arith.subf %33, %36 : vector<16x1xf32>
    %40 = math.exp %39 : vector<16x1xf32>
    %41 = arith.subf %34, %36 : vector<16x1xf32>
    %42 = math.exp %41 : vector<16x1xf32>
    %43 = arith.addf %38, %40 : vector<16x1xf32>
    %44 = arith.addf %43, %42 : vector<16x1xf32>
    %45 = tpu.reciprocal %44 {approx = true} : vector<16x1xf32> -> vector<16x1xf32>
    %46 = arith.mulf %38, %45 : vector<16x1xf32>
    %47 = arith.mulf %40, %45 : vector<16x1xf32>
    %48 = arith.mulf %42, %45 : vector<16x1xf32>
    %cst_27 = arith.constant 0.000000e+00 : f32
    %49 = vector.broadcast %cst_27 : f32 to vector<16x1xf32>
    %50 = vector.extract_strided_slice %19 {offsets = [0, 0], sizes = [16, 7], strides = [1, 1]} : vector<16x8xf32> to vector<16x7xf32>
    %51 = tpu.concatenate %49, %50 in 1 : vector<16x1xf32>, vector<16x7xf32> -> vector<16x8xf32>
    %52 = vector.extract_strided_slice %19 {offsets = [0, 1], sizes = [16, 7], strides = [1, 1]} : vector<16x8xf32> to vector<16x7xf32>
    %53 = tpu.concatenate %52, %49 in 1 : vector<16x7xf32>, vector<16x1xf32> -> vector<16x8xf32>
    %54 = vector.broadcast %46 : vector<16x1xf32> to vector<16x8xf32>
    %55 = arith.mulf %51, %54 : vector<16x8xf32>
    %56 = vector.broadcast %47 : vector<16x1xf32> to vector<16x8xf32>
    %57 = arith.mulf %19, %56 : vector<16x8xf32>
    %58 = arith.addf %55, %57 : vector<16x8xf32>
    %59 = vector.broadcast %48 : vector<16x1xf32> to vector<16x8xf32>
    %60 = arith.mulf %53, %59 : vector<16x8xf32>
    %61 = arith.addf %58, %60 : vector<16x8xf32>
    %62 = vector.extract_strided_slice %61 {offsets = [0, 1], sizes = [16, 7], strides = [1, 1]} : vector<16x8xf32> to vector<16x7xf32>
    %63 = vector.extract_strided_slice %61 {offsets = [0, 0], sizes = [16, 7], strides = [1, 1]} : vector<16x8xf32> to vector<16x7xf32>
    %64 = arith.subf %62, %63 : vector<16x7xf32>
    %65 = tpu.concatenate %64, %49 in 1 : vector<16x7xf32>, vector<16x1xf32> -> vector<16x8xf32>
    %c0_28 = arith.constant 0 : index
    %c0_29 = arith.constant 0 : index
    %66 = vector.load %arg10[%c0_28, %c0_29] : memref<16x16xf32, #tpu.memory_space<vmem>>, vector<16x16xf32>
    %cst_30 = arith.constant dense<0.000000e+00> : vector<16x8xf32>
    %67 = tpu.matmul %66, %65, %cst_30 {dimension_numbers = #tpu.dot_dimension_numbers<[1], [0], [0], [1], [0, 0, 1, 1], [], []>} : vector<16x16xf32>, vector<16x8xf32>, vector<16x8xf32> -> vector<16x8xf32>
    %cst_31 = arith.constant 0.000000e+00 : f32
    %68 = vector.broadcast %cst_31 : f32 to vector<16x8xf32>
    %69 = arith.subf %68, %67 : vector<16x8xf32>
    %70 = math.exp %69 : vector<16x8xf32>
    %cst_32 = arith.constant 1.000000e+00 : f32
    %71 = vector.broadcast %cst_32 : f32 to vector<16x8xf32>
    %72 = arith.addf %71, %70 : vector<16x8xf32>
    %cst_33 = arith.constant 1.000000e+00 : f32
    %73 = vector.broadcast %cst_33 : f32 to vector<16x8xf32>
    %74 = arith.divf %73, %72 : vector<16x8xf32>
    %c0_34 = arith.constant 0 : index
    %c0_35 = arith.constant 0 : index
    %c0_36 = arith.constant 0 : index
    %c0_37 = arith.constant 0 : index
    %75 = vector.load %arg1[%c0_34, %c0_35, %c0_36, %c0_37] : memref<1x8x4x256xf32, #tpu.memory_space<vmem>>, vector<1x1x4x256xf32>
    %76 = vector.shape_cast %75 : vector<1x1x4x256xf32> to vector<4x256xf32>
    %cst_38 = arith.constant dense<0.000000e+00> : vector<16x256xf32>
    %77 = tpu.matmul %0, %76, %cst_38 {dimension_numbers = #tpu.dot_dimension_numbers<[1], [0], [0], [1], [0, 0, 1, 1], [], []>} : vector<16x4xf32>, vector<4x256xf32>, vector<16x256xf32> -> vector<16x256xf32>
    %78 = vector.broadcast %1 : vector<16x1xf32> to vector<16x256xf32>
    %79 = arith.addf %77, %78 : vector<16x256xf32>
    %80 = vector.broadcast %17 : vector<16x1xf32> to vector<16x256xf32>
    %81 = arith.addf %79, %80 : vector<16x256xf32>
    %c0_39 = arith.constant 0 : index
    %c1 = arith.constant 1 : index
    %c0_40 = arith.constant 0 : index
    %c0_41 = arith.constant 0 : index
    %82 = vector.load %arg1[%c0_39, %c1, %c0_40, %c0_41] : memref<1x8x4x256xf32, #tpu.memory_space<vmem>>, vector<1x1x4x256xf32>
    %83 = vector.shape_cast %82 : vector<1x1x4x256xf32> to vector<4x256xf32>
    %cst_42 = arith.constant dense<0.000000e+00> : vector<16x256xf32>
    %84 = tpu.matmul %0, %83, %cst_42 {dimension_numbers = #tpu.dot_dimension_numbers<[1], [0], [0], [1], [0, 0, 1, 1], [], []>} : vector<16x4xf32>, vector<4x256xf32>, vector<16x256xf32> -> vector<16x256xf32>
    %85 = vector.broadcast %1 : vector<16x1xf32> to vector<16x256xf32>
    %86 = arith.addf %84, %85 : vector<16x256xf32>
    %87 = vector.broadcast %17 : vector<16x1xf32> to vector<16x256xf32>
    %88 = arith.addf %86, %87 : vector<16x256xf32>
    %89 = vector.broadcast %47 : vector<16x1xf32> to vector<16x256xf32>
    %90 = arith.mulf %81, %89 : vector<16x256xf32>
    %91 = vector.broadcast %48 : vector<16x1xf32> to vector<16x256xf32>
    %92 = arith.mulf %88, %91 : vector<16x256xf32>
    %93 = arith.addf %90, %92 : vector<16x256xf32>
    %94 = vector.extract_strided_slice %74 {offsets = [0, 0], sizes = [16, 1], strides = [1, 1]} : vector<16x8xf32> to vector<16x1xf32>
    %95 = vector.broadcast %94 : vector<16x1xf32> to vector<16x256xf32>
    %96 = arith.mulf %93, %95 : vector<16x256xf32>
    %c0_43 = arith.constant 0 : index
    %c0_44 = arith.constant 0 : index
    %c0_45 = arith.constant 0 : index
    %c0_46 = arith.constant 0 : index
    %97 = vector.load %arg11[%c0_43, %c0_44, %c0_45, %c0_46] : memref<1x8x16x256xf32, #tpu.memory_space<vmem>>, vector<1x1x16x256xf32>
    %98 = vector.shape_cast %97 : vector<1x1x16x256xf32> to vector<16x256xf32>
    %99 = vector.shape_cast %96 : vector<16x256xf32> to vector<1x1x16x256xf32>
    tpu.vector_store %arg11[%c0_43, %c0_44, %c0_45, %c0_46], %99 {strides = array<i32>} : memref<1x8x16x256xf32, #tpu.memory_space<vmem>>, vector<1x1x16x256xf32>,
    %c0_47 = arith.constant 0 : index
    %c2 = arith.constant 2 : index
    %c0_48 = arith.constant 0 : index
    %c0_49 = arith.constant 0 : index
    %100 = vector.load %arg1[%c0_47, %c2, %c0_48, %c0_49] : memref<1x8x4x256xf32, #tpu.memory_space<vmem>>, vector<1x1x4x256xf32>
    %101 = vector.shape_cast %100 : vector<1x1x4x256xf32> to vector<4x256xf32>
    %cst_50 = arith.constant dense<0.000000e+00> : vector<16x256xf32>
    %102 = tpu.matmul %0, %101, %cst_50 {dimension_numbers = #tpu.dot_dimension_numbers<[1], [0], [0], [1], [0, 0, 1, 1], [], []>} : vector<16x4xf32>, vector<4x256xf32>, vector<16x256xf32> -> vector<16x256xf32>
    %103 = vector.broadcast %1 : vector<16x1xf32> to vector<16x256xf32>
    %104 = arith.addf %102, %103 : vector<16x256xf32>
    %105 = vector.broadcast %17 : vector<16x1xf32> to vector<16x256xf32>
    %106 = arith.addf %104, %105 : vector<16x256xf32>
    %107 = vector.broadcast %47 : vector<16x1xf32> to vector<16x256xf32>
    %108 = arith.mulf %88, %107 : vector<16x256xf32>
    %109 = vector.broadcast %46 : vector<16x1xf32> to vector<16x256xf32>
    %110 = arith.mulf %81, %109 : vector<16x256xf32>
    %111 = arith.addf %108, %110 : vector<16x256xf32>
    %112 = vector.broadcast %48 : vector<16x1xf32> to vector<16x256xf32>
    %113 = arith.mulf %106, %112 : vector<16x256xf32>
    %114 = arith.addf %111, %113 : vector<16x256xf32>
    %115 = vector.extract_strided_slice %74 {offsets = [0, 1], sizes = [16, 1], strides = [1, 1]} : vector<16x8xf32> to vector<16x1xf32>
    %116 = vector.broadcast %115 : vector<16x1xf32> to vector<16x256xf32>
    %117 = arith.mulf %114, %116 : vector<16x256xf32>
    %c0_51 = arith.constant 0 : index
    %c1_52 = arith.constant 1 : index
    %c0_53 = arith.constant 0 : index
    %c0_54 = arith.constant 0 : index
    %118 = vector.load %arg11[%c0_51, %c1_52, %c0_53, %c0_54] : memref<1x8x16x256xf32, #tpu.memory_space<vmem>>, vector<1x1x16x256xf32>
    %119 = vector.shape_cast %118 : vector<1x1x16x256xf32> to vector<16x256xf32>
    %120 = vector.shape_cast %117 : vector<16x256xf32> to vector<1x1x16x256xf32>
    tpu.vector_store %arg11[%c0_51, %c1_52, %c0_53, %c0_54], %120 {strides = array<i32>} : memref<1x8x16x256xf32, #tpu.memory_space<vmem>>, vector<1x1x16x256xf32>,
    %c0_55 = arith.constant 0 : index
    %c3 = arith.constant 3 : index
    %c0_56 = arith.constant 0 : index
    %c0_57 = arith.constant 0 : index
    %121 = vector.load %arg1[%c0_55, %c3, %c0_56, %c0_57] : memref<1x8x4x256xf32, #tpu.memory_space<vmem>>, vector<1x1x4x256xf32>
    %122 = vector.shape_cast %121 : vector<1x1x4x256xf32> to vector<4x256xf32>
    %cst_58 = arith.constant dense<0.000000e+00> : vector<16x256xf32>
    %123 = tpu.matmul %0, %122, %cst_58 {dimension_numbers = #tpu.dot_dimension_numbers<[1], [0], [0], [1], [0, 0, 1, 1], [], []>} : vector<16x4xf32>, vector<4x256xf32>, vector<16x256xf32> -> vector<16x256xf32>
    %124 = vector.broadcast %1 : vector<16x1xf32> to vector<16x256xf32>
    %125 = arith.addf %123, %124 : vector<16x256xf32>
    %126 = vector.broadcast %17 : vector<16x1xf32> to vector<16x256xf32>
    %127 = arith.addf %125, %126 : vector<16x256xf32>
    %128 = vector.broadcast %47 : vector<16x1xf32> to vector<16x256xf32>
    %129 = arith.mulf %106, %128 : vector<16x256xf32>
    %130 = vector.broadcast %46 : vector<16x1xf32> to vector<16x256xf32>
    %131 = arith.mulf %88, %130 : vector<16x256xf32>
    %132 = arith.addf %129, %131 : vector<16x256xf32>
    %133 = vector.broadcast %48 : vector<16x1xf32> to vector<16x256xf32>
    %134 = arith.mulf %127, %133 : vector<16x256xf32>
    %135 = arith.addf %132, %134 : vector<16x256xf32>
    %136 = vector.extract_strided_slice %74 {offsets = [0, 2], sizes = [16, 1], strides = [1, 1]} : vector<16x8xf32> to vector<16x1xf32>
    %137 = vector.broadcast %136 : vector<16x1xf32> to vector<16x256xf32>
    %138 = arith.mulf %135, %137 : vector<16x256xf32>
    %c0_59 = arith.constant 0 : index
    %c2_60 = arith.constant 2 : index
    %c0_61 = arith.constant 0 : index
    %c0_62 = arith.constant 0 : index
    %139 = vector.load %arg11[%c0_59, %c2_60, %c0_61, %c0_62] : memref<1x8x16x256xf32, #tpu.memory_space<vmem>>, vector<1x1x16x256xf32>
    %140 = vector.shape_cast %139 : vector<1x1x16x256xf32> to vector<16x256xf32>
    %141 = vector.shape_cast %138 : vector<16x256xf32> to vector<1x1x16x256xf32>
    tpu.vector_store %arg11[%c0_59, %c2_60, %c0_61, %c0_62], %141 {strides = array<i32>} : memref<1x8x16x256xf32, #tpu.memory_space<vmem>>, vector<1x1x16x256xf32>,
    %c0_63 = arith.constant 0 : index
    %c4 = arith.constant 4 : index
    %c0_64 = arith.constant 0 : index
    %c0_65 = arith.constant 0 : index
    %142 = vector.load %arg1[%c0_63, %c4, %c0_64, %c0_65] : memref<1x8x4x256xf32, #tpu.memory_space<vmem>>, vector<1x1x4x256xf32>
    %143 = vector.shape_cast %142 : vector<1x1x4x256xf32> to vector<4x256xf32>
    %cst_66 = arith.constant dense<0.000000e+00> : vector<16x256xf32>
    %144 = tpu.matmul %0, %143, %cst_66 {dimension_numbers = #tpu.dot_dimension_numbers<[1], [0], [0], [1], [0, 0, 1, 1], [], []>} : vector<16x4xf32>, vector<4x256xf32>, vector<16x256xf32> -> vector<16x256xf32>
    %145 = vector.broadcast %1 : vector<16x1xf32> to vector<16x256xf32>
    %146 = arith.addf %144, %145 : vector<16x256xf32>
    %147 = vector.broadcast %17 : vector<16x1xf32> to vector<16x256xf32>
    %148 = arith.addf %146, %147 : vector<16x256xf32>
    %149 = vector.broadcast %47 : vector<16x1xf32> to vector<16x256xf32>
    %150 = arith.mulf %127, %149 : vector<16x256xf32>
    %151 = vector.broadcast %46 : vector<16x1xf32> to vector<16x256xf32>
    %152 = arith.mulf %106, %151 : vector<16x256xf32>
    %153 = arith.addf %150, %152 : vector<16x256xf32>
    %154 = vector.broadcast %48 : vector<16x1xf32> to vector<16x256xf32>
    %155 = arith.mulf %148, %154 : vector<16x256xf32>
    %156 = arith.addf %153, %155 : vector<16x256xf32>
    %157 = vector.extract_strided_slice %74 {offsets = [0, 3], sizes = [16, 1], strides = [1, 1]} : vector<16x8xf32> to vector<16x1xf32>
    %158 = vector.broadcast %157 : vector<16x1xf32> to vector<16x256xf32>
    %159 = arith.mulf %156, %158 : vector<16x256xf32>
    %c0_67 = arith.constant 0 : index
    %c3_68 = arith.constant 3 : index
    %c0_69 = arith.constant 0 : index
    %c0_70 = arith.constant 0 : index
    %160 = vector.load %arg11[%c0_67, %c3_68, %c0_69, %c0_70] : memref<1x8x16x256xf32, #tpu.memory_space<vmem>>, vector<1x1x16x256xf32>
    %161 = vector.shape_cast %160 : vector<1x1x16x256xf32> to vector<16x256xf32>
    %162 = vector.shape_cast %159 : vector<16x256xf32> to vector<1x1x16x256xf32>
    tpu.vector_store %arg11[%c0_67, %c3_68, %c0_69, %c0_70], %162 {strides = array<i32>} : memref<1x8x16x256xf32, #tpu.memory_space<vmem>>, vector<1x1x16x256xf32>,
    %c0_71 = arith.constant 0 : index
    %c5 = arith.constant 5 : index
    %c0_72 = arith.constant 0 : index
    %c0_73 = arith.constant 0 : index
    %163 = vector.load %arg1[%c0_71, %c5, %c0_72, %c0_73] : memref<1x8x4x256xf32, #tpu.memory_space<vmem>>, vector<1x1x4x256xf32>
    %164 = vector.shape_cast %163 : vector<1x1x4x256xf32> to vector<4x256xf32>
    %cst_74 = arith.constant dense<0.000000e+00> : vector<16x256xf32>
    %165 = tpu.matmul %0, %164, %cst_74 {dimension_numbers = #tpu.dot_dimension_numbers<[1], [0], [0], [1], [0, 0, 1, 1], [], []>} : vector<16x4xf32>, vector<4x256xf32>, vector<16x256xf32> -> vector<16x256xf32>
    %166 = vector.broadcast %1 : vector<16x1xf32> to vector<16x256xf32>
    %167 = arith.addf %165, %166 : vector<16x256xf32>
    %168 = vector.broadcast %17 : vector<16x1xf32> to vector<16x256xf32>
    %169 = arith.addf %167, %168 : vector<16x256xf32>
    %170 = vector.broadcast %47 : vector<16x1xf32> to vector<16x256xf32>
    %171 = arith.mulf %148, %170 : vector<16x256xf32>
    %172 = vector.broadcast %46 : vector<16x1xf32> to vector<16x256xf32>
    %173 = arith.mulf %127, %172 : vector<16x256xf32>
    %174 = arith.addf %171, %173 : vector<16x256xf32>
    %175 = vector.broadcast %48 : vector<16x1xf32> to vector<16x256xf32>
    %176 = arith.mulf %169, %175 : vector<16x256xf32>
    %177 = arith.addf %174, %176 : vector<16x256xf32>
    %178 = vector.extract_strided_slice %74 {offsets = [0, 4], sizes = [16, 1], strides = [1, 1]} : vector<16x8xf32> to vector<16x1xf32>
    %179 = vector.broadcast %178 : vector<16x1xf32> to vector<16x256xf32>
    %180 = arith.mulf %177, %179 : vector<16x256xf32>
    %c0_75 = arith.constant 0 : index
    %c4_76 = arith.constant 4 : index
    %c0_77 = arith.constant 0 : index
    %c0_78 = arith.constant 0 : index
    %181 = vector.load %arg11[%c0_75, %c4_76, %c0_77, %c0_78] : memref<1x8x16x256xf32, #tpu.memory_space<vmem>>, vector<1x1x16x256xf32>
    %182 = vector.shape_cast %181 : vector<1x1x16x256xf32> to vector<16x256xf32>
    %183 = vector.shape_cast %180 : vector<16x256xf32> to vector<1x1x16x256xf32>
    tpu.vector_store %arg11[%c0_75, %c4_76, %c0_77, %c0_78], %183 {strides = array<i32>} : memref<1x8x16x256xf32, #tpu.memory_space<vmem>>, vector<1x1x16x256xf32>,
    %c0_79 = arith.constant 0 : index
    %c6 = arith.constant 6 : index
    %c0_80 = arith.constant 0 : index
    %c0_81 = arith.constant 0 : index
    %184 = vector.load %arg1[%c0_79, %c6, %c0_80, %c0_81] : memref<1x8x4x256xf32, #tpu.memory_space<vmem>>, vector<1x1x4x256xf32>
    %185 = vector.shape_cast %184 : vector<1x1x4x256xf32> to vector<4x256xf32>
    %cst_82 = arith.constant dense<0.000000e+00> : vector<16x256xf32>
    %186 = tpu.matmul %0, %185, %cst_82 {dimension_numbers = #tpu.dot_dimension_numbers<[1], [0], [0], [1], [0, 0, 1, 1], [], []>} : vector<16x4xf32>, vector<4x256xf32>, vector<16x256xf32> -> vector<16x256xf32>
    %187 = vector.broadcast %1 : vector<16x1xf32> to vector<16x256xf32>
    %188 = arith.addf %186, %187 : vector<16x256xf32>
    %189 = vector.broadcast %17 : vector<16x1xf32> to vector<16x256xf32>
    %190 = arith.addf %188, %189 : vector<16x256xf32>
    %191 = vector.broadcast %47 : vector<16x1xf32> to vector<16x256xf32>
    %192 = arith.mulf %169, %191 : vector<16x256xf32>
    %193 = vector.broadcast %46 : vector<16x1xf32> to vector<16x256xf32>
    %194 = arith.mulf %148, %193 : vector<16x256xf32>
    %195 = arith.addf %192, %194 : vector<16x256xf32>
    %196 = vector.broadcast %48 : vector<16x1xf32> to vector<16x256xf32>
    %197 = arith.mulf %190, %196 : vector<16x256xf32>
    %198 = arith.addf %195, %197 : vector<16x256xf32>
    %199 = vector.extract_strided_slice %74 {offsets = [0, 5], sizes = [16, 1], strides = [1, 1]} : vector<16x8xf32> to vector<16x1xf32>
    %200 = vector.broadcast %199 : vector<16x1xf32> to vector<16x256xf32>
    %201 = arith.mulf %198, %200 : vector<16x256xf32>
    %c0_83 = arith.constant 0 : index
    %c5_84 = arith.constant 5 : index
    %c0_85 = arith.constant 0 : index
    %c0_86 = arith.constant 0 : index
    %202 = vector.load %arg11[%c0_83, %c5_84, %c0_85, %c0_86] : memref<1x8x16x256xf32, #tpu.memory_space<vmem>>, vector<1x1x16x256xf32>
    %203 = vector.shape_cast %202 : vector<1x1x16x256xf32> to vector<16x256xf32>
    %204 = vector.shape_cast %201 : vector<16x256xf32> to vector<1x1x16x256xf32>
    tpu.vector_store %arg11[%c0_83, %c5_84, %c0_85, %c0_86], %204 {strides = array<i32>} : memref<1x8x16x256xf32, #tpu.memory_space<vmem>>, vector<1x1x16x256xf32>,
    %c0_87 = arith.constant 0 : index
    %c7 = arith.constant 7 : index
    %c0_88 = arith.constant 0 : index
    %c0_89 = arith.constant 0 : index
    %205 = vector.load %arg1[%c0_87, %c7, %c0_88, %c0_89] : memref<1x8x4x256xf32, #tpu.memory_space<vmem>>, vector<1x1x4x256xf32>
    %206 = vector.shape_cast %205 : vector<1x1x4x256xf32> to vector<4x256xf32>
    %cst_90 = arith.constant dense<0.000000e+00> : vector<16x256xf32>
    %207 = tpu.matmul %0, %206, %cst_90 {dimension_numbers = #tpu.dot_dimension_numbers<[1], [0], [0], [1], [0, 0, 1, 1], [], []>} : vector<16x4xf32>, vector<4x256xf32>, vector<16x256xf32> -> vector<16x256xf32>
    %208 = vector.broadcast %1 : vector<16x1xf32> to vector<16x256xf32>
    %209 = arith.addf %207, %208 : vector<16x256xf32>
    %210 = vector.broadcast %17 : vector<16x1xf32> to vector<16x256xf32>
    %211 = arith.addf %209, %210 : vector<16x256xf32>
    %212 = vector.broadcast %47 : vector<16x1xf32> to vector<16x256xf32>
    %213 = arith.mulf %190, %212 : vector<16x256xf32>
    %214 = vector.broadcast %46 : vector<16x1xf32> to vector<16x256xf32>
    %215 = arith.mulf %169, %214 : vector<16x256xf32>
    %216 = arith.addf %213, %215 : vector<16x256xf32>
    %217 = vector.broadcast %48 : vector<16x1xf32> to vector<16x256xf32>
    %218 = arith.mulf %211, %217 : vector<16x256xf32>
    %219 = arith.addf %216, %218 : vector<16x256xf32>
    %220 = vector.extract_strided_slice %74 {offsets = [0, 6], sizes = [16, 1], strides = [1, 1]} : vector<16x8xf32> to vector<16x1xf32>
    %221 = vector.broadcast %220 : vector<16x1xf32> to vector<16x256xf32>
    %222 = arith.mulf %219, %221 : vector<16x256xf32>
    %c0_91 = arith.constant 0 : index
    %c6_92 = arith.constant 6 : index
    %c0_93 = arith.constant 0 : index
    %c0_94 = arith.constant 0 : index
    %223 = vector.load %arg11[%c0_91, %c6_92, %c0_93, %c0_94] : memref<1x8x16x256xf32, #tpu.memory_space<vmem>>, vector<1x1x16x256xf32>
    %224 = vector.shape_cast %223 : vector<1x1x16x256xf32> to vector<16x256xf32>
    %225 = vector.shape_cast %222 : vector<16x256xf32> to vector<1x1x16x256xf32>
    tpu.vector_store %arg11[%c0_91, %c6_92, %c0_93, %c0_94], %225 {strides = array<i32>} : memref<1x8x16x256xf32, #tpu.memory_space<vmem>>, vector<1x1x16x256xf32>,
    %226 = vector.broadcast %47 : vector<16x1xf32> to vector<16x256xf32>
    %227 = arith.mulf %211, %226 : vector<16x256xf32>
    %228 = vector.broadcast %46 : vector<16x1xf32> to vector<16x256xf32>
    %229 = arith.mulf %190, %228 : vector<16x256xf32>
    %230 = arith.addf %227, %229 : vector<16x256xf32>
    %231 = vector.extract_strided_slice %74 {offsets = [0, 7], sizes = [16, 1], strides = [1, 1]} : vector<16x8xf32> to vector<16x1xf32>
    %232 = vector.broadcast %231 : vector<16x1xf32> to vector<16x256xf32>
    %233 = arith.mulf %230, %232 : vector<16x256xf32>
    %c0_95 = arith.constant 0 : index
    %c7_96 = arith.constant 7 : index
    %c0_97 = arith.constant 0 : index
    %c0_98 = arith.constant 0 : index
    %234 = vector.load %arg11[%c0_95, %c7_96, %c0_97, %c0_98] : memref<1x8x16x256xf32, #tpu.memory_space<vmem>>, vector<1x1x16x256xf32>
    %235 = vector.shape_cast %234 : vector<1x1x16x256xf32> to vector<16x256xf32>
    %236 = vector.shape_cast %233 : vector<16x256xf32> to vector<1x1x16x256xf32>
    tpu.vector_store %arg11[%c0_95, %c7_96, %c0_97, %c0_98], %236 {strides = array<i32>} : memref<1x8x16x256xf32, #tpu.memory_space<vmem>>, vector<1x1x16x256xf32>,
    return
  }
  func.func @transform_0(%arg0: i32) -> (i32, i32, i32, i32) {
    %c0_i32 = arith.constant 0 : i32
    %c0_i32_0 = arith.constant 0 : i32
    %c0_i32_1 = arith.constant 0 : i32
    %c0_i32_2 = arith.constant 0 : i32
    return %arg0, %c0_i32, %c0_i32_0, %c0_i32_1 : i32, i32, i32, i32
  }
  func.func @transform_1(%arg0: i32) -> (i32, i32) {
    %c0_i32 = arith.constant 0 : i32
    %c0_i32_0 = arith.constant 0 : i32
    %c0_i32_1 = arith.constant 0 : i32
    return %c0_i32, %c0_i32_0 : i32, i32
  }
  func.func @transform_2(%arg0: i32) -> (i32, i32) {
    %c0_i32 = arith.constant 0 : i32
    %c0_i32_0 = arith.constant 0 : i32
    %c0_i32_1 = arith.constant 0 : i32
    return %c0_i32, %c0_i32_0 : i32, i32
  }
  func.func @transform_3(%arg0: i32) -> (i32, i32) {
    %c0_i32 = arith.constant 0 : i32
    %c0_i32_0 = arith.constant 0 : i32
    %c0_i32_1 = arith.constant 0 : i32
    return %c0_i32, %c0_i32_0 : i32, i32
  }
  func.func @transform_4(%arg0: i32) -> (i32, i32) {
    %c0_i32 = arith.constant 0 : i32
    %c0_i32_0 = arith.constant 0 : i32
    %c0_i32_1 = arith.constant 0 : i32
    return %c0_i32, %c0_i32_0 : i32, i32
  }
  func.func @transform_5(%arg0: i32) -> (i32, i32) {
    %c0_i32 = arith.constant 0 : i32
    %c0_i32_0 = arith.constant 0 : i32
    %c0_i32_1 = arith.constant 0 : i32
    return %c0_i32, %c0_i32_0 : i32, i32
  }
  func.func @transform_6(%arg0: i32) -> (i32, i32) {
    %c0_i32 = arith.constant 0 : i32
    %c0_i32_0 = arith.constant 0 : i32
    %c0_i32_1 = arith.constant 0 : i32
    return %c0_i32, %c0_i32_0 : i32, i32
  }
  func.func @transform_7(%arg0: i32) -> (i32, i32) {
    %c0_i32 = arith.constant 0 : i32
    %c0_i32_0 = arith.constant 0 : i32
    %c0_i32_1 = arith.constant 0 : i32
    return %c0_i32, %c0_i32_0 : i32, i32
  }
  func.func @transform_8(%arg0: i32) -> (i32, i32) {
    %c0_i32 = arith.constant 0 : i32
    %c0_i32_0 = arith.constant 0 : i32
    %c0_i32_1 = arith.constant 0 : i32
    return %c0_i32, %c0_i32_0 : i32, i32
  }
  func.func @transform_9(%arg0: i32) -> (i32, i32) {
    %c0_i32 = arith.constant 0 : i32
    %c0_i32_0 = arith.constant 0 : i32
    %c0_i32_1 = arith.constant 0 : i32
    return %c0_i32, %c0_i32_0 : i32, i32
  }
  func.func @transform_10(%arg0: i32) -> (i32, i32, i32, i32) {
    %c0_i32 = arith.constant 0 : i32
    %c0_i32_0 = arith.constant 0 : i32
    %c0_i32_1 = arith.constant 0 : i32
    %c0_i32_2 = arith.constant 0 : i32
    return %arg0, %c0_i32, %c0_i32_0, %c0_i32_1 : i32, i32, i32, i32
  }
}

</mosaic_0001>

<llo_original>
// kernel: lamme_forward.1
$region0: #{lamme_forward.1}
  #allocation0 [shape = 'u32[]', space=smem, size = 0x4, offset = 0x4, fixed_abs, tag = 'smem constant byte address 0x4 - core index']
  #allocation1 [shape = 'u32[72,128]{1,0:T(1,128)}', space=vmem, size = 0x9000, scoped, tag = 'internal scratch']
  %s0 = inlined_call_operand.vmem [shape: f32[2,8,4,256], index: 0, kind: input, shape index: {}]
  %s1 = inlined_call_operand.vmem [shape: f32[16,4], index: 1, kind: input, shape index: {}]
  %s2 = inlined_call_operand.vmem [shape: f32[16,1], index: 2, kind: input, shape index: {}]
  %s3 = inlined_call_operand.hbm [shape: f32[16,16], index: 3, kind: input, shape index: {}]
  %s4 = inlined_call_operand.vmem [shape: f32[16,1], index: 4, kind: input, shape index: {}]
  %s5 = inlined_call_operand.hbm [shape: f32[8,16], index: 5, kind: input, shape index: {}]
  %s6 = inlined_call_operand.vmem [shape: f32[1,16], index: 6, kind: input, shape index: {}]
  %s7 = inlined_call_operand.vmem [shape: f32[1,16], index: 7, kind: input, shape index: {}]
  %s8 = inlined_call_operand.vmem [shape: f32[16,3], index: 8, kind: input, shape index: {}]
  %s9 = inlined_call_operand.vmem [shape: f32[16,16], index: 9, kind: input, shape index: {}]
  %s10 = inlined_call_operand.vmem [shape: f32[2,8,16,256], index: 10, kind: output, shape index: {}]
  %s11 = sld [smem:[#allocation0]]
  $region81: #{lamme_forward.1} parent=0
    _
  %s13 = ssub.s32 1, %s11
  %s14 = scalar_select 0, %s13, %s11
  $region1: #{lamme_forward.1} parent=0
    #allocation2 [shape = 'u8[8192]{0}', space=vmem, size = 0x2000, scoped, tag = 'input window, operand 3, single buffered']
    #allocation3 [shape = 's32[2]{0}', space=sflag, size = 0x8, scoped, tag = 'scoped memory for lamme_forward.1']
    #allocation4 [shape = 'u8[4096]{0}', space=vmem, size = 0x1000, scoped, tag = 'input window, operand 5, single buffered']
    #allocation5 [shape = 's32[1]{0}', space=sflag, size = 0x4, scoped, tag = 'scoped memory for lamme_forward.1']
    %15 = vsyncpa [#allocation3], 0
    %16 = vsyncpa [#allocation5], 0
    loop: start=0, step=1, limit=4
    $region2: #{lamme_forward.1} parent=1 // loop_pre_header
      _
    $region3: #{lamme_forward.1} parent=1 // loop_header
      %s18 = sphi 0, %s22
      %p19 = scmp.ge.s32.totalorder %s18, 4
      %s28 = sphi 0, %s30
      %s31 = sphi 0, %s28
      %s32 = sphi 0, %s31
      %s48 = sphi 0, %s32
      %s52 = sphi 0, %s52
      %s54 = sphi 0, %s52
      %s55 = sphi 0, %s54
      %s69 = sphi 0, %s55
      %s73 = sphi 0, %s73
      %s75 = sphi 0, %s73
      %s76 = sphi 0, %s75
      %s90 = sphi 0, %s76
      %s94 = sphi 0, %s94
      %s96 = sphi 0, %s94
      %s97 = sphi 0, %s96
      %s111 = sphi 0, %s97
      %s115 = sphi 0, %s115
      %s117 = sphi 0, %s115
      %s118 = sphi 0, %s117
      %s132 = sphi 0, %s118
      %s136 = sphi 0, %s136
      %s138 = sphi 0, %s136
      %s139 = sphi 0, %s138
      %s153 = sphi 0, %s139
      %s157 = sphi 0, %s157
      %s159 = sphi 0, %s157
      %s160 = sphi 0, %s159
      %s174 = sphi 0, %s160
      %s178 = sphi 0, %s178
      %s180 = sphi 0, %s178
      %s181 = sphi 0, %s180
      %s195 = sphi 0, %s181
      %s199 = sphi 0, %s199
      %s201 = sphi 0, %s199
      %s202 = sphi 0, %s201
      %s216 = sphi 0, %s202
      %s220 = sphi 0, %s220
      %s222 = sphi 0, %s220
      %s223 = sphi 0, %s222
      %s237 = sphi 0, %s223
      %s243 = sphi 0, %s245
      %s246 = sphi 0, %s243
      %s247 = sphi 0, %s246
      %s263 = sphi 0, %s247
    $region4: #{lamme_forward.1} parent=1 // loop_header_branch
      %21 = sbr.rel (%p19) target = $region8
    $region5: #{lamme_forward.1} parent=1 // loop_body
      %s23 = ssub.s32 %s18, 1
      %s24 = ssub.s32 %s18, 2
      %s25 = sadd.s32 %s18, 1
      %s26 = ssub.s32 %s18, %s25
      %p27 = scmp.eq.s32.totalorder %s26, 0
      %s29 = sadd.s32 %s28, 1
      %s30 = scalar_select %p27, %s28, %s29
      %p33 = pneg %p27
      %p34 = scmp.eq.s32.totalorder %s18, 1
      %p35 = por %p33, %p34
      %p36 = scmp.ne.s32.totalorder %s28, %s31
      %p37 = scmp.eq.s32.totalorder %s18, 0
      %p38 = por %p36, %p37
      %p39 = scmp.ne.s32.totalorder %s28, %s31
      %p40 = scmp.eq.s32.totalorder %s23, 1
      %p41 = por %p39, %p40
      %p42 = scmp.ne.s32.totalorder %s31, %s32
      %p43 = scmp.eq.s32.totalorder %s23, 0
      %p44 = por %p42, %p43
      %p45 = scmp.ne.s32.totalorder %s31, %s32
      %p46 = scmp.eq.s32.totalorder %s24, 1
      %p47 = por %p45, %p46
      %p49 = scmp.ne.s32.totalorder %s32, %s48
      %p50 = scmp.eq.s32.totalorder %s24, 0
      %p51 = por %p49, %p50
      %s53 = sadd.s32 %s52, 1
      %p56 = scmp.eq.s32.totalorder %s18, 1
      %p57 = scmp.ne.s32.totalorder %s52, %s54
      %p58 = scmp.eq.s32.totalorder %s18, 0
      %p59 = por %p57, %p58
      %p60 = scmp.ne.s32.totalorder %s52, %s54
      %p61 = scmp.eq.s32.totalorder %s23, 1
      %p62 = por %p60, %p61
      %p63 = scmp.ne.s32.totalorder %s54, %s55
      %p64 = scmp.eq.s32.totalorder %s23, 0
      %p65 = por %p63, %p64
      %p66 = scmp.ne.s32.totalorder %s54, %s55
      %p67 = scmp.eq.s32.totalorder %s24, 1
      %p68 = por %p66, %p67
      %p70 = scmp.ne.s32.totalorder %s55, %s69
      %p71 = scmp.eq.s32.totalorder %s24, 0
      %p72 = por %p70, %p71
      %s74 = sadd.s32 %s73, 1
      %p77 = scmp.eq.s32.totalorder %s18, 1
      %p78 = scmp.ne.s32.totalorder %s73, %s75
      %p79 = scmp.eq.s32.totalorder %s18, 0
      %p80 = por %p78, %p79
      %p81 = scmp.ne.s32.totalorder %s73, %s75
      %p82 = scmp.eq.s32.totalorder %s23, 1
      %p83 = por %p81, %p82
      %p84 = scmp.ne.s32.totalorder %s75, %s76
      %p85 = scmp.eq.s32.totalorder %s23, 0
      %p86 = por %p84, %p85
      %p87 = scmp.ne.s32.totalorder %s75, %s76
      %p88 = scmp.eq.s32.totalorder %s24, 1
      %p89 = por %p87, %p88
      %p91 = scmp.ne.s32.totalorder %s76, %s90
      %p92 = scmp.eq.s32.totalorder %s24, 0
      %p93 = por %p91, %p92
      %s95 = sadd.s32 %s94, 1
      %p98 = scmp.eq.s32.totalorder %s18, 1
      %p99 = scmp.ne.s32.totalorder %s94, %s96
      %p100 = scmp.eq.s32.totalorder %s18, 0
      %p101 = por %p99, %p100
      %p102 = scmp.ne.s32.totalorder %s94, %s96
      %p103 = scmp.eq.s32.totalorder %s23, 1
      %p104 = por %p102, %p103
      %p105 = scmp.ne.s32.totalorder %s96, %s97
      %p106 = scmp.eq.s32.totalorder %s23, 0
      %p107 = por %p105, %p106
      %p108 = scmp.ne.s32.totalorder %s96, %s97
      %p109 = scmp.eq.s32.totalorder %s24, 1
      %p110 = por %p108, %p109
      %p112 = scmp.ne.s32.totalorder %s97, %s111
      %p113 = scmp.eq.s32.totalorder %s24, 0
      %p114 = por %p112, %p113
      %s116 = sadd.s32 %s115, 1
      %p119 = scmp.eq.s32.totalorder %s18, 1
      %p120 = scmp.ne.s32.totalorder %s115, %s117
      %p121 = scmp.eq.s32.totalorder %s18, 0
      %p122 = por %p120, %p121
      %p123 = scmp.ne.s32.totalorder %s115, %s117
      %p124 = scmp.eq.s32.totalorder %s23, 1
      %p125 = por %p123, %p124
      %p126 = scmp.ne.s32.totalorder %s117, %s118
      %p127 = scmp.eq.s32.totalorder %s23, 0
      %p128 = por %p126, %p127
      %p129 = scmp.ne.s32.totalorder %s117, %s118
      %p130 = scmp.eq.s32.totalorder %s24, 1
      %p131 = por %p129, %p130
      %p133 = scmp.ne.s32.totalorder %s118, %s132
      %p134 = scmp.eq.s32.totalorder %s24, 0
      %p135 = por %p133, %p134
      %s137 = sadd.s32 %s136, 1
      %p140 = scmp.eq.s32.totalorder %s18, 1
      %p141 = scmp.ne.s32.totalorder %s136, %s138
      %p142 = scmp.eq.s32.totalorder %s18, 0
      %p143 = por %p141, %p142
      %p144 = scmp.ne.s32.totalorder %s136, %s138
      %p145 = scmp.eq.s32.totalorder %s23, 1
      %p146 = por %p144, %p145
      %p147 = scmp.ne.s32.totalorder %s138, %s139
      %p148 = scmp.eq.s32.totalorder %s23, 0
      %p149 = por %p147, %p148
      %p150 = scmp.ne.s32.totalorder %s138, %s139
      %p151 = scmp.eq.s32.totalorder %s24, 1
      %p152 = por %p150, %p151
      %p154 = scmp.ne.s32.totalorder %s139, %s153
      %p155 = scmp.eq.s32.totalorder %s24, 0
      %p156 = por %p154, %p155
      %s158 = sadd.s32 %s157, 1
      %p161 = scmp.eq.s32.totalorder %s18, 1
      %p162 = scmp.ne.s32.totalorder %s157, %s159
      %p163 = scmp.eq.s32.totalorder %s18, 0
      %p164 = por %p162, %p163
      %p165 = scmp.ne.s32.totalorder %s157, %s159
      %p166 = scmp.eq.s32.totalorder %s23, 1
      %p167 = por %p165, %p166
      %p168 = scmp.ne.s32.totalorder %s159, %s160
      %p169 = scmp.eq.s32.totalorder %s23, 0
      %p170 = por %p168, %p169
      %p171 = scmp.ne.s32.totalorder %s159, %s160
      %p172 = scmp.eq.s32.totalorder %s24, 1
      %p173 = por %p171, %p172
      %p175 = scmp.ne.s32.totalorder %s160, %s174
      %p176 = scmp.eq.s32.totalorder %s24, 0
      %p177 = por %p175, %p176
      %s179 = sadd.s32 %s178, 1
      %p182 = scmp.eq.s32.totalorder %s18, 1
      %p183 = scmp.ne.s32.totalorder %s178, %s180
      %p184 = scmp.eq.s32.totalorder %s18, 0
      %p185 = por %p183, %p184
      %p186 = scmp.ne.s32.totalorder %s178, %s180
      %p187 = scmp.eq.s32.totalorder %s23, 1
      %p188 = por %p186, %p187
      %p189 = scmp.ne.s32.totalorder %s180, %s181
      %p190 = scmp.eq.s32.totalorder %s23, 0
      %p191 = por %p189, %p190
      %p192 = scmp.ne.s32.totalorder %s180, %s181
      %p193 = scmp.eq.s32.totalorder %s24, 1
      %p194 = por %p192, %p193
      %p196 = scmp.ne.s32.totalorder %s181, %s195
      %p197 = scmp.eq.s32.totalorder %s24, 0
      %p198 = por %p196, %p197
      %s200 = sadd.s32 %s199, 1
      %p203 = scmp.eq.s32.totalorder %s18, 1
      %p204 = scmp.ne.s32.totalorder %s199, %s201
      %p205 = scmp.eq.s32.totalorder %s18, 0
      %p206 = por %p204, %p205
      %p207 = scmp.ne.s32.totalorder %s199, %s201
      %p208 = scmp.eq.s32.totalorder %s23, 1
      %p209 = por %p207, %p208
      %p210 = scmp.ne.s32.totalorder %s201, %s202
      %p211 = scmp.eq.s32.totalorder %s23, 0
      %p212 = por %p210, %p211
      %p213 = scmp.ne.s32.totalorder %s201, %s202
      %p214 = scmp.eq.s32.totalorder %s24, 1
      %p215 = por %p213, %p214
      %p217 = scmp.ne.s32.totalorder %s202, %s216
      %p218 = scmp.eq.s32.totalorder %s24, 0
      %p219 = por %p217, %p218
      %s221 = sadd.s32 %s220, 1
      %p224 = scmp.eq.s32.totalorder %s18, 1
      %p225 = scmp.ne.s32.totalorder %s220, %s222
      %p226 = scmp.eq.s32.totalorder %s18, 0
      %p227 = por %p225, %p226
      %p228 = scmp.ne.s32.totalorder %s220, %s222
      %p229 = scmp.eq.s32.totalorder %s23, 1
      %p230 = por %p228, %p229
      %p231 = scmp.ne.s32.totalorder %s222, %s223
      %p232 = scmp.eq.s32.totalorder %s23, 0
      %p233 = por %p231, %p232
      %p234 = scmp.ne.s32.totalorder %s222, %s223
      %p235 = scmp.eq.s32.totalorder %s24, 1
      %p236 = por %p234, %p235
      %p238 = scmp.ne.s32.totalorder %s223, %s237
      %p239 = scmp.eq.s32.totalorder %s24, 0
      %p240 = por %p238, %p239
      %s241 = ssub.s32 %s18, %s25
      %p242 = scmp.eq.s32.totalorder %s241, 0
      %s244 = sadd.s32 %s243, 1
      %s245 = scalar_select %p242, %s243, %s244
      %p248 = pneg %p242
      %p249 = scmp.eq.s32.totalorder %s18, 1
      %p250 = por %p248, %p249
      %p251 = scmp.ne.s32.totalorder %s243, %s246
      %p252 = scmp.eq.s32.totalorder %s18, 0
      %p253 = por %p251, %p252
      %p254 = scmp.ne.s32.totalorder %s243, %s246
      %p255 = scmp.eq.s32.totalorder %s23, 1
      %p256 = por %p254, %p255
      %p257 = scmp.ne.s32.totalorder %s246, %s247
      %p258 = scmp.eq.s32.totalorder %s23, 0
      %p259 = por %p257, %p258
      %p260 = scmp.ne.s32.totalorder %s246, %s247
      %p261 = scmp.eq.s32.totalorder %s24, 1
      %p262 = por %p260, %p261
      %p264 = scmp.ne.s32.totalorder %s247, %s263
      %p265 = scmp.eq.s32.totalorder %s24, 0
      %p266 = por %p264, %p265
      %p267 = scmp.le.s32.totalorder 1, %s18
      %p268 = scmp.lt.s32.totalorder %s18, 3
      %p269 = pnand %p267, %p268
      %p270 = pneg %p269
      // Predicated region
      $region9: #{lamme_forward.1} parent=5 // pred_check
        _
      $region10: #{lamme_forward.1} parent=5 // pred_check_branch
        %272 = sbr.rel (%p269) target = $region12
      $region11: #{lamme_forward.1} parent=5 // pred_region
        %s273 = ssub.s32 %s18, 1
        // Predicated region
        $region13: #{lamme_forward.1} parent=11 // pred_check
          %p274 = pneg %p65
        $region14: #{lamme_forward.1} parent=11 // pred_check_branch
          %276 = sbr.rel (%p274) target = $region16
        $region15: #{lamme_forward.1} parent=11 // pred_region
          _
        $region16: #{lamme_forward.1} parent=11 // pred_fallthru
          _
        // Predicated region
        $region17: #{lamme_forward.1} parent=11 // pred_check
          %p277 = pneg %p86
        $region18: #{lamme_forward.1} parent=11 // pred_check_branch
          %279 = sbr.rel (%p277) target = $region20
        $region19: #{lamme_forward.1} parent=11 // pred_region
          _
        $region20: #{lamme_forward.1} parent=11 // pred_fallthru
          _
        // Predicated region
        $region21: #{lamme_forward.1} parent=11 // pred_check
          %p280 = pneg %p107
        $region22: #{lamme_forward.1} parent=11 // pred_check_branch
          %282 = sbr.rel (%p280) target = $region24
        $region23: #{lamme_forward.1} parent=11 // pred_region
          %284 = vsyncadd [#allocation3], 0
          %s285 = sshll.u32 %s3, 4
          %s286 = int_to_ptr.hbm [resolvable:$true] %s285
          %s287 = sshll.u32 [#allocation2], 4
          %s288 = int_to_ptr.vmem [resolvable:$true] %s287
          %293 = dma.hbm_to_vmem [thread:$0]  %s286, 256, %s288, [#allocation3], 128, 128, 8
        $region24: #{lamme_forward.1} parent=11 // pred_fallthru
          _
        // Predicated region
        $region25: #{lamme_forward.1} parent=11 // pred_check
          %p294 = pneg %p128
        $region26: #{lamme_forward.1} parent=11 // pred_check_branch
          %296 = sbr.rel (%p294) target = $region28
        $region27: #{lamme_forward.1} parent=11 // pred_region
          _
        $region28: #{lamme_forward.1} parent=11 // pred_fallthru
          _
        // Predicated region
        $region29: #{lamme_forward.1} parent=11 // pred_check
          %p297 = pneg %p149
        $region30: #{lamme_forward.1} parent=11 // pred_check_branch
          %299 = sbr.rel (%p297) target = $region32
        $region31: #{lamme_forward.1} parent=11 // pred_region
          %301 = vsyncadd [#allocation5], 0
          %s303 = sshll.u32 %s5, 4
          %s304 = int_to_ptr.hbm [resolvable:$true] %s303
          %s305 = sshll.u32 [#allocation4], 4
          %s306 = int_to_ptr.vmem [resolvable:$true] %s305
          %308 = dma.hbm_to_vmem [thread:$0]  %s304, 128, %s306, [#allocation5]
        $region32: #{lamme_forward.1} parent=11 // pred_fallthru
          _
        // Predicated region
        $region33: #{lamme_forward.1} parent=11 // pred_check
          %p309 = pneg %p170
        $region34: #{lamme_forward.1} parent=11 // pred_check_branch
          %311 = sbr.rel (%p309) target = $region36
        $region35: #{lamme_forward.1} parent=11 // pred_region
          _
        $region36: #{lamme_forward.1} parent=11 // pred_fallthru
          _
        // Predicated region
        $region37: #{lamme_forward.1} parent=11 // pred_check
          %p312 = pneg %p191
        $region38: #{lamme_forward.1} parent=11 // pred_check_branch
          %314 = sbr.rel (%p312) target = $region40
        $region39: #{lamme_forward.1} parent=11 // pred_region
          _
        $region40: #{lamme_forward.1} parent=11 // pred_fallthru
          _
        // Predicated region
        $region41: #{lamme_forward.1} parent=11 // pred_check
          %p315 = pneg %p212
        $region42: #{lamme_forward.1} parent=11 // pred_check_branch
          %317 = sbr.rel (%p315) target = $region44
        $region43: #{lamme_forward.1} parent=11 // pred_region
          _
        $region44: #{lamme_forward.1} parent=11 // pred_fallthru
          _
        // Predicated region
        $region45: #{lamme_forward.1} parent=11 // pred_check
          %p318 = pneg %p233
        $region46: #{lamme_forward.1} parent=11 // pred_check_branch
          %320 = sbr.rel (%p318) target = $region48
        $region47: #{lamme_forward.1} parent=11 // pred_region
          _
        $region48: #{lamme_forward.1} parent=11 // pred_fallthru
          _
      $region12: #{lamme_forward.1} parent=5 // pred_fallthru
        _
      %p321 = scmp.lt.s32.totalorder %s18, 2
      // Predicated region
      $region49: #{lamme_forward.1} parent=5 // pred_check
        %p322 = pneg %p321
      $region50: #{lamme_forward.1} parent=5 // pred_check_branch
        %324 = sbr.rel (%p322) target = $region52
      $region51: #{lamme_forward.1} parent=5 // pred_region
        // Predicated region
        $region53: #{lamme_forward.1} parent=51 // pred_check
          %p325 = pneg %p38
        $region54: #{lamme_forward.1} parent=51 // pred_check_branch
          %327 = sbr.rel (%p325) target = $region56
        $region55: #{lamme_forward.1} parent=51 // pred_region
          %p328 = scmp.lt.s32.totalorder %s18, 1
          %s329 = scalar_select %p328, %s18, 1
          %s330 = smul.addr %s329, 16
          %s331 = smul.addr %s330, 4
          %s332 = scalar_lea.vmem %s0, %s331
        $region56: #{lamme_forward.1} parent=51 // pred_fallthru
          _
      $region52: #{lamme_forward.1} parent=5 // pred_fallthru
        _
      %p333 = scmp.le.s32.totalorder 1, %s18
      %p334 = scmp.lt.s32.totalorder %s18, 3
      %p335 = pnand %p333, %p334
      %p336 = pneg %p335
      // Predicated region
      $region57: #{lamme_forward.1} parent=5 // pred_check
        _
      $region58: #{lamme_forward.1} parent=5 // pred_check_branch
        %338 = sbr.rel (%p335) target = $region60
      $region59: #{lamme_forward.1} parent=5 // pred_region
        %s339 = ssub.s32 %s18, 1
        // Predicated region
        $region61: #{lamme_forward.1} parent=59 // pred_check
          %p340 = pneg %p107
        $region62: #{lamme_forward.1} parent=59 // pred_check_branch
          %342 = sbr.rel (%p340) target = $region64
        $region63: #{lamme_forward.1} parent=59 // pred_region
          %344 = dma.done [#allocation3], 256
        $region64: #{lamme_forward.1} parent=59 // pred_fallthru
          _
        // Predicated region
        $region65: #{lamme_forward.1} parent=59 // pred_check
          %p345 = pneg %p149
        $region66: #{lamme_forward.1} parent=59 // pred_check_branch
          %347 = sbr.rel (%p345) target = $region68
        $region67: #{lamme_forward.1} parent=59 // pred_region
          %349 = dma.done [#allocation5], 128
        $region68: #{lamme_forward.1} parent=59 // pred_fallthru
          _
        %p350 = scmp.lt.s32.totalorder %s23, 1
        %s351 = scalar_select %p350, %s23, 1
        %s352 = smul.addr %s351, 16
        %s353 = smul.addr %s352, 4
        %s354 = scalar_lea.vmem %s0, %s353
        %p355 = pneg %p44
        %p356 = pneg %p41
        %p357 = pneg %p65
        %p358 = pneg %p62
        %p359 = pneg %p86
        %p360 = pneg %p83
        %p361 = pneg %p107
        %p362 = pneg %p104
        %p363 = pneg %p128
        %p364 = pneg %p125
        %p365 = pneg %p149
        %p366 = pneg %p146
        %p367 = pneg %p170
        %p368 = pneg %p167
        %p369 = pneg %p191
        %p370 = pneg %p188
        %p371 = pneg %p212
        %p372 = pneg %p209
        %p373 = pneg %p233
        %p374 = pneg %p230
        %p375 = pneg %p259
        %p376 = pneg %p256
        %p377 = scmp.lt.s32.totalorder %s23, 1
        %s378 = scalar_select %p377, %s23, 1
        %s379 = smul.addr %s378, 32
        %s380 = smul.addr %s379, 8
        %s381 = scalar_lea.vmem %s10, %s380
        %p382 = scmp.lt.s32.totalorder %s23, 1
        %s383 = scalar_select %p382, %s23, 1
        %s384 = smul.addr %s383, 16
        %s385 = smul.addr %s384, 4
        %s386 = scalar_lea.vmem %s0, %s385
        %p387 = scmp.lt.s32.totalorder %s23, 1
        %s388 = scalar_select %p387, %s23, 1
        %s389 = smul.addr %s388, 32
        %s390 = smul.addr %s389, 8
        %s391 = scalar_lea.vmem %s10, %s390
        %v392 = vld [vmem:[%s1] sm:$0xff]
        %v393 = vld [vmem:[%s1 + $0x8] sm:$0xff]
        %v394 = vld [vmem:[%s2] sm:$0xff]
        %v395 = vld [vmem:[%s2 + $0x8] sm:$0xff]
        %v396 = vld [vmem:[%s386] sm:$0xff]
        %v397 = vld [vmem:[%s386 + $0x8] sm:$0xff]
        %v398 = vld [vmem:[%s386 + $0x10] sm:$0xff]
        %v399 = vld [vmem:[%s386 + $0x18] sm:$0xff]
        %v400 = vld [vmem:[%s386 + $0x20] sm:$0xff]
        %v401 = vld [vmem:[%s386 + $0x28] sm:$0xff]
        %v402 = vld [vmem:[%s386 + $0x30] sm:$0xff]
        %v403 = vld [vmem:[%s386 + $0x38] sm:$0xff]
        %412 = vst [vmem:[#allocation1] ss:$2 sm:$0xff] %v396
        %v413 = vld.sshfl [vmem:[#allocation1] sm:$0xff pattern:$0x75316420]
        %v414 = vld.sshfl [vmem:[#allocation1 + $0x8] sm:$0xff pattern:$0x75316420]
        %s415 = scalar_lea.vmem [#allocation1], 16
        %416 = vst [vmem:[%s415] ss:$2 sm:$0xff] %v397
        %v417 = vld.sshfl [vmem:[#allocation1 + $0x10] sm:$0xff pattern:$0x75316420]
        %v418 = vld.sshfl [vmem:[#allocation1 + $0x18] sm:$0xff pattern:$0x75316420]
        %s419 = scalar_lea.vmem [#allocation1], 32
        %420 = vst [vmem:[%s419] ss:$2 sm:$0xff] %v398
        %v421 = vld.sshfl [vmem:[#allocation1 + $0x20] sm:$0xff pattern:$0x75316420]
        %v422 = vld.sshfl [vmem:[#allocation1 + $0x28] sm:$0xff pattern:$0x75316420]
        %s423 = scalar_lea.vmem [#allocation1], 48
        %424 = vst [vmem:[%s423] ss:$2 sm:$0xff] %v399
        %v425 = vld.sshfl [vmem:[#allocation1 + $0x30] sm:$0xff pattern:$0x75316420]
        %v426 = vld.sshfl [vmem:[#allocation1 + $0x38] sm:$0xff pattern:$0x75316420]
        %427 = vst [vmem:[#allocation1] ss:$2 sm:$0xff] %v400
        %v428 = vld.sshfl [vmem:[#allocation1] sm:$0xff pattern:$0x75316420]
        %v429 = vld.sshfl [vmem:[#allocation1 + $0x8] sm:$0xff pattern:$0x75316420]
        %430 = vst [vmem:[%s415] ss:$2 sm:$0xff] %v401
        %v431 = vld.sshfl [vmem:[#allocation1 + $0x10] sm:$0xff pattern:$0x75316420]
        %v432 = vld.sshfl [vmem:[#allocation1 + $0x18] sm:$0xff pattern:$0x75316420]
        %433 = vst [vmem:[%s419] ss:$2 sm:$0xff] %v402
        %v434 = vld.sshfl [vmem:[#allocation1 + $0x20] sm:$0xff pattern:$0x75316420]
        %v435 = vld.sshfl [vmem:[#allocation1 + $0x28] sm:$0xff pattern:$0x75316420]
        %436 = vst [vmem:[%s423] ss:$2 sm:$0xff] %v403
        %v437 = vld.sshfl [vmem:[#allocation1 + $0x30] sm:$0xff pattern:$0x75316420]
        %v438 = vld.sshfl [vmem:[#allocation1 + $0x38] sm:$0xff pattern:$0x75316420]
        %vm455 = vcmask 1043456
        %v456 = vsel %vm455, %v413, 0.0
        %v457 = vsel %vm455, %v414, 0.0
        %v458 = vadd.f32 %v456, %v457
        %459 = vadd.xlane.f32.xlu0 %v458
        %v460 = vpop.xlane.xlu0 %459
        %v461 = vsel %vm455, %v417, 0.0
        %v462 = vsel %vm455, %v418, 0.0
        %v463 = vadd.f32 %v461, %v462
        %464 = vadd.xlane.f32.xlu0 %v463
        %v465 = vpop.xlane.xlu0 %464
        %v466 = vsel %vm455, %v421, 0.0
        %v467 = vsel %vm455, %v422, 0.0
        %v468 = vadd.f32 %v466, %v467
        %469 = vadd.xlane.f32.xlu0 %v468
        %v470 = vpop.xlane.xlu0 %469
        %v471 = vsel %vm455, %v425, 0.0
        %v472 = vsel %vm455, %v426, 0.0
        %v473 = vadd.f32 %v471, %v472
        %474 = vadd.xlane.f32.xlu0 %v473
        %v475 = vpop.xlane.xlu0 %474
        %v476 = vsel %vm455, %v428, 0.0
        %v477 = vsel %vm455, %v429, 0.0
        %v478 = vadd.f32 %v476, %v477
        %479 = vadd.xlane.f32.xlu0 %v478
        %v480 = vpop.xlane.xlu0 %479
        %v481 = vsel %vm455, %v431, 0.0
        %v482 = vsel %vm455, %v432, 0.0
        %v483 = vadd.f32 %v481, %v482
        %484 = vadd.xlane.f32.xlu0 %v483
        %v485 = vpop.xlane.xlu0 %484
        %v486 = vsel %vm455, %v434, 0.0
        %v487 = vsel %vm455, %v435, 0.0
        %v488 = vadd.f32 %v486, %v487
        %489 = vadd.xlane.f32.xlu0 %v488
        %v490 = vpop.xlane.xlu0 %489
        %v491 = vsel %vm455, %v437, 0.0
        %v492 = vsel %vm455, %v438, 0.0
        %v493 = vadd.f32 %v491, %v492
        %494 = vadd.xlane.f32.xlu0 %v493
        %v495 = vpop.xlane.xlu0 %494
        %v496 = vrcp.pop 256.0
        %v497 = vmul.f32 256.0, %v496
        %v498 = vsub.f32 1.0, %v497
        %v499 = vmul.f32 %v496, %v498
        %v500 = vadd.f32 %v496, %v499
        %vm501 = vweird.f32 %v496
        %v502 = vsel %vm501, %v496, %v500
        %v503 = vmul.f32 %v460, %v502
        %v504 = vmul.f32 %v465, %v502
        %v505 = vmul.f32 %v470, %v502
        %v506 = vmul.f32 %v475, %v502
        %v507 = vmul.f32 %v480, %v502
        %v508 = vmul.f32 %v485, %v502
        %v509 = vmul.f32 %v490, %v502
        %v510 = vmul.f32 %v495, %v502
        %512 = vset.pattern.permute.xlu0 0
        %513 = vperm.xlu0 %512, %v394
        %v514 = vpop.permute.xlu0 %513
        %517 = vset.pattern.permute.xlu0 0
        %518 = vperm.xlu0 %517, %v395
        %v519 = vpop.permute.xlu0 %518
        %v529 = vlaneseq
        %v530 = vand.u32 %v529, 127
        %v531 = vperm.slane %v503, %v530
        %v532 = vperm.slane %v504, %v530
        %v533 = vperm.slane %v505, %v530
        %v534 = vperm.slane %v506, %v530
        %v535 = vperm.slane %v507, %v530
        %v536 = vperm.slane %v508, %v530
        %v537 = vperm.slane %v509, %v530
        %v538 = vperm.slane %v510, %v530
        %vm539 = vcmask 1041409
        %v540 = vsel %vm539, %v532, %v531
        %vm541 = vcmask 1042434
        %v542 = vsel %vm541, %v533, %v540
        %vm543 = vcmask 1043459
        %v544 = vsel %vm543, %v534, %v542
        %vm545 = vcmask 1044484
        %v546 = vsel %vm545, %v535, %v544
        %vm547 = vcmask 1045509
        %v548 = vsel %vm547, %v536, %v546
        %vm549 = vcmask 1046534
        %v550 = vsel %vm549, %v537, %v548
        %vm551 = vcmask 1047559
        %v552 = vsel %vm551, %v538, %v550
        %vm553 = vcmask 31744
        %v555 = vsel %vm553, %v392, 0
        %v558 = vsel %vm553, %v393, 0
        %v560 = vsel %vm553, %v552, 0
        %562 = vmatpush.xpose.msra.mxu0 0.0
        %563 = vmatpush.xpose.msra.mxu0 0.0
        %564 = vmatpush.xpose.msra.mxu0 0.0
        %565 = vmatpush.xpose.msra.mxu0 0.0
        %566 = vmatpush.xpose.msra.mxu0 0.0
        %567 = vmatpush.xpose.msra.mxu0 0.0
        %568 = vmatpush.xpose.msra.mxu0 0.0
        %569 = vmatpush.xpose.msra.mxu0 0.0
        %570 = vmatpush.xpose.msra.mxu0 0.0
        %571 = vmatpush.xpose.msra.mxu0 0.0
        %572 = vmatpush.xpose.msra.mxu0 0.0
        %573 = vmatpush.xpose.msra.mxu0 0.0
        %574 = vmatpush.xpose.msra.mxu0 0.0
        %575 = vmatpush.xpose.msra.mxu0 0.0
        %576 = vmatpush.xpose.msra.mxu0 0.0
        %577 = vmatpush.xpose.msra.mxu0 %v560
        %578 = vmatmul.f32.gmra.mxu0 %v555
        %v579 = vpop.f32.mrf.mxu0
        %v580 = vadd.f32 %v514, %v579
        %581 = vmatmul.f32.gmra.mxu0 %v558
        %v582 = vpop.f32.mrf.mxu0
        %v583 = vadd.f32 %v519, %v582
        %584 = vdwg.mxu0
        %vm585 = vcmask 64512
        %v586 = vsel %vm585, %v580, 0.0
        %587 = vadd.xlane.f32.xlu0 %v586
        %v588 = vpop.xlane.xlu0 %587
        %v589 = vsel %vm585, %v583, 0.0
        %590 = vadd.xlane.f32.xlu0 %v589
        %v591 = vpop.xlane.xlu0 %590
        %v592 = vrcp.pop 8.0
        %v593 = vmul.f32 8.0, %v592
        %v594 = vsub.f32 1.0, %v593
        %v595 = vmul.f32 %v592, %v594
        %v596 = vadd.f32 %v592, %v595
        %vm597 = vweird.f32 %v592
        %v598 = vsel %vm597, %v592, %v596
        %v599 = vmul.f32 %v588, %v598
        %v600 = vmul.f32 %v591, %v598
        %v601 = vld [vmem:[#allocation2] sm:$0xff]
        %v602 = vld [vmem:[#allocation2 + $0x8] sm:$0xff]
        %v603 = vld [vmem:[%s4] sm:$0xff]
        %v604 = vld [vmem:[%s4 + $0x8] sm:$0xff]
        %vm605 = vcmask 130048
        %v607 = vsel %vm605, %v601, 0
        %v610 = vsel %vm605, %v602, 0
        %612 = vmatpush.msra.mxu0 0.0
        %613 = vmatpush.msra.mxu0 0.0
        %614 = vmatpush.msra.mxu0 0.0
        %615 = vmatpush.msra.mxu0 0.0
        %616 = vmatpush.msra.mxu0 0.0
        %617 = vmatpush.msra.mxu0 0.0
        %618 = vmatpush.msra.mxu0 0.0
        %619 = vmatpush.msra.mxu0 0.0
        %620 = vmatpush.msra.mxu0 0.0
        %621 = vmatpush.msra.mxu0 0.0
        %622 = vmatpush.msra.mxu0 0.0
        %623 = vmatpush.msra.mxu0 0.0
        %624 = vmatpush.msra.mxu0 0.0
        %625 = vmatpush.msra.mxu0 0.0
        %626 = vmatpush.msra.mxu0 %v600
        %627 = vmatpush.msra.mxu0 %v599
        %628 = vmatmul.f32.gmra.mxu0 %v607
        %v629 = vpop.f32.mrf.mxu0
        %v630 = vadd.f32 %v603, %v629
        %631 = vmatmul.f32.gmra.mxu0 %v610
        %v632 = vpop.f32.mrf.mxu0
        %v633 = vadd.f32 %v604, %v632
        %634 = vdwg.mxu0
        %636 = vset.pattern.permute.xlu0 0
        %637 = vperm.xlu0 %636, %v630
        %v638 = vpop.permute.xlu0 %637
        %641 = vset.pattern.permute.xlu0 0
        %642 = vperm.xlu0 %641, %v633
        %v643 = vpop.permute.xlu0 %642
        %v645 = vadd.f32 %v580, %v638
        %v646 = vadd.f32 %v583, %v643
        %v647 = vld [vmem:[#allocation4] sm:$0xff]
        %v649 = vsel %vm585, %v645, 0
        %v652 = vsel %vm585, %v646, 0
        %654 = vmatpush.msra.mxu0 0.0
        %655 = vmatpush.msra.mxu0 0.0
        %656 = vmatpush.msra.mxu0 0.0
        %657 = vmatpush.msra.mxu0 0.0
        %658 = vmatpush.msra.mxu0 0.0
        %659 = vmatpush.msra.mxu0 0.0
        %660 = vmatpush.msra.mxu0 0.0
        %661 = vmatpush.msra.mxu0 0.0
        %662 = vmatpush.msra.mxu0 0.0
        %663 = vmatpush.msra.mxu0 0.0
        %664 = vmatpush.msra.mxu0 0.0
        %665 = vmatpush.msra.mxu0 0.0
        %666 = vmatpush.msra.mxu0 0.0
        %667 = vmatpush.msra.mxu0 0.0
        %668 = vmatpush.msra.mxu0 0.0
        %669 = vmatpush.msra.mxu0 %v647
        %670 = vmatmul.f32.gmra.mxu0 %v649
        %v671 = vpop.f32.mrf.mxu0
        %v672 = vadd.f32 0.0, %v671
        %673 = vmatmul.f32.gmra.mxu0 %v652
        %v674 = vpop.f32.mrf.mxu0
        %v675 = vadd.f32 0.0, %v674
        %676 = vdwg.mxu0
        %v677 = vld [vmem:[%s6] sm:$0x1]
        %v679 = vperm.slane %v677, 0
        %v681 = vmul.f32 %v672, %v679
        %v682 = vmul.f32 %v675, %v679
        %v683 = vld [vmem:[%s7] sm:$0x1]
        %v685 = vperm.slane %v683, 0
        %v687 = vadd.f32 %v681, %v685
        %v688 = vadd.f32 %v682, %v685
        %v689 = vmax.f32 %v687, 0.0
        %v690 = vmax.f32 %v688, 0.0
        %v691 = vld [vmem:[%s8] sm:$0xff]
        %v692 = vld [vmem:[%s8 + $0x8] sm:$0xff]
        %v694 = vsel %vm605, %v689, 0
        %v697 = vsel %vm605, %v690, 0
        %699 = vmatpush.msra.mxu0 0.0
        %700 = vmatpush.msra.mxu0 0.0
        %701 = vmatpush.msra.mxu0 0.0
        %702 = vmatpush.msra.mxu0 0.0
        %703 = vmatpush.msra.mxu0 0.0
        %704 = vmatpush.msra.mxu0 0.0
        %705 = vmatpush.msra.mxu0 0.0
        %706 = vmatpush.msra.mxu0 0.0
        %707 = vmatpush.msra.mxu0 0.0
        %708 = vmatpush.msra.mxu0 0.0
        %709 = vmatpush.msra.mxu0 0.0
        %710 = vmatpush.msra.mxu0 0.0
        %711 = vmatpush.msra.mxu0 0.0
        %712 = vmatpush.msra.mxu0 0.0
        %713 = vmatpush.msra.mxu0 %v692
        %714 = vmatpush.msra.mxu0 %v691
        %715 = vmatmul.f32.gmra.mxu0 %v694
        %v716 = vpop.f32.mrf.mxu0
        %v717 = vadd.f32 0.0, %v716
        %718 = vmatmul.f32.gmra.mxu0 %v697
        %v719 = vpop.f32.mrf.mxu0
        %v720 = vadd.f32 0.0, %v719
        %721 = vdwg.mxu0
        %724 = vrot.lane.b32.xlu0 %v717, 127
        %v725 = vpop.permute.xlu0 %724
        %726 = vrot.lane.b32.xlu0 %v720, 127
        %v727 = vpop.permute.xlu0 %726
        %v730 = vmax.f32 %v717, %v725
        %v731 = vmax.f32 %v720, %v727
        %732 = vrot.lane.b32.xlu0 %v717, 126
        %v733 = vpop.permute.xlu0 %732
        %734 = vrot.lane.b32.xlu0 %v720, 126
        %v735 = vpop.permute.xlu0 %734
        %v738 = vmax.f32 %v730, %v733
        %v739 = vmax.f32 %v731, %v735
        %v740 = vsub.f32 %v717, %v738
        %v741 = vsub.f32 %v720, %v739
        %v742 = vmul.f32 %v740, 1.442695
        %v743 = vpow.pop %v742
        %v744 = vmul.f32 %v741, 1.442695
        %v745 = vpow.pop %v744
        %748 = vrot.lane.b32.xlu0 %v738, 1
        %v749 = vpop.permute.xlu0 %748
        %750 = vrot.lane.b32.xlu0 %v739, 1
        %v751 = vpop.permute.xlu0 %750
        %v754 = vsub.f32 %v717, %v749
        %v755 = vsub.f32 %v720, %v751
        %v756 = vmul.f32 %v754, 1.442695
        %v757 = vpow.pop %v756
        %v758 = vmul.f32 %v755, 1.442695
        %v759 = vpow.pop %v758
        %760 = vrot.lane.b32.xlu0 %v738, 2
        %v761 = vpop.permute.xlu0 %760
        %762 = vrot.lane.b32.xlu0 %v739, 2
        %v763 = vpop.permute.xlu0 %762
        %v766 = vsub.f32 %v717, %v761
        %v767 = vsub.f32 %v720, %v763
        %v768 = vmul.f32 %v766, 1.442695
        %v769 = vpow.pop %v768
        %v770 = vmul.f32 %v767, 1.442695
        %v771 = vpow.pop %v770
        %774 = vrot.lane.b32.xlu0 %v757, 127
        %v775 = vpop.permute.xlu0 %774
        %776 = vrot.lane.b32.xlu0 %v759, 127
        %v777 = vpop.permute.xlu0 %776
        %v780 = vadd.f32 %v743, %v775
        %v781 = vadd.f32 %v745, %v777
        %784 = vrot.lane.b32.xlu0 %v769, 126
        %v785 = vpop.permute.xlu0 %784
        %786 = vrot.lane.b32.xlu0 %v771, 126
        %v787 = vpop.permute.xlu0 %786
        %v790 = vadd.f32 %v780, %v785
        %v791 = vadd.f32 %v781, %v787
        %v792 = vrcp.pop %v790
        %v793 = vrcp.pop %v791
        %v794 = vmul.f32 %v743, %v792
        %v795 = vmul.f32 %v745, %v793
        %798 = vrot.lane.b32.xlu0 %v792, 1
        %v799 = vpop.permute.xlu0 %798
        %800 = vrot.lane.b32.xlu0 %v793, 1
        %v801 = vpop.permute.xlu0 %800
        %v804 = vmul.f32 %v757, %v799
        %v805 = vmul.f32 %v759, %v801
        %806 = vrot.lane.b32.xlu0 %v792, 2
        %v807 = vpop.permute.xlu0 %806
        %808 = vrot.lane.b32.xlu0 %v793, 2
        %v809 = vpop.permute.xlu0 %808
        %v812 = vmul.f32 %v769, %v807
        %v813 = vmul.f32 %v771, %v809
        %814 = vrot.lane.b32.xlu0 %v645, 1
        %v815 = vpop.permute.xlu0 %814
        %816 = vrot.lane.b32.xlu0 %v646, 1
        %v817 = vpop.permute.xlu0 %816
        %vm820 = vcmask 7168
        %v821 = vsel %vm820, 0.0, %v815
        %v822 = vsel %vm820, 0.0, %v817
        %823 = vrot.lane.b32.xlu0 %v645, 127
        %v824 = vpop.permute.xlu0 %823
        %825 = vrot.lane.b32.xlu0 %v646, 127
        %v826 = vpop.permute.xlu0 %825
        %vm829 = vcmask 56320
        %v830 = vsel %vm829, %v824, 0.0
        %v831 = vsel %vm829, %v826, 0.0
        %833 = vset.pattern.permute.xlu0 0
        %834 = vperm.xlu0 %833, %v794
        %v835 = vpop.permute.xlu0 %834
        %838 = vset.pattern.permute.xlu0 0
        %839 = vperm.xlu0 %838, %v795
        %v840 = vpop.permute.xlu0 %839
        %v842 = vmul.f32 %v821, %v835
        %v843 = vmul.f32 %v822, %v840
        %845 = vset.pattern.permute.xlu0 1
        %846 = vperm.xlu0 %845, %v804
        %v847 = vpop.permute.xlu0 %846
        %850 = vset.pattern.permute.xlu0 1
        %851 = vperm.xlu0 %850, %v805
        %v852 = vpop.permute.xlu0 %851
        %v854 = vmul.f32 %v645, %v847
        %v855 = vmul.f32 %v646, %v852
        %v856 = vadd.f32 %v842, %v854
        %v857 = vadd.f32 %v843, %v855
        %859 = vset.pattern.permute.xlu0 2
        %860 = vperm.xlu0 %859, %v812
        %v861 = vpop.permute.xlu0 %860
        %864 = vset.pattern.permute.xlu0 2
        %865 = vperm.xlu0 %864, %v813
        %v866 = vpop.permute.xlu0 %865
        %v868 = vmul.f32 %v830, %v861
        %v869 = vmul.f32 %v831, %v866
        %v870 = vadd.f32 %v856, %v868
        %v871 = vadd.f32 %v857, %v869
        %874 = vrot.lane.b32.xlu0 %v870, 1
        %v875 = vpop.permute.xlu0 %874
        %876 = vrot.lane.b32.xlu0 %v871, 1
        %v877 = vpop.permute.xlu0 %876
        %v880 = vsub.f32 %v870, %v875
        %v881 = vsub.f32 %v871, %v877
        %884 = vrot.lane.b32.xlu0 %v880, 127
        %v885 = vpop.permute.xlu0 %884
        %886 = vrot.lane.b32.xlu0 %v881, 127
        %v887 = vpop.permute.xlu0 %886
        %v890 = vsel %vm829, %v885, 0.0
        %v891 = vsel %vm829, %v887, 0.0
        %v892 = vld [vmem:[%s9] sm:$0xff]
        %v893 = vld [vmem:[%s9 + $0x8] sm:$0xff]
        %v895 = vsel %vm605, %v892, 0
        %v898 = vsel %vm605, %v893, 0
        %900 = vmatpush.msra.mxu0 0.0
        %901 = vmatpush.msra.mxu0 0.0
        %902 = vmatpush.msra.mxu0 0.0
        %903 = vmatpush.msra.mxu0 0.0
        %904 = vmatpush.msra.mxu0 0.0
        %905 = vmatpush.msra.mxu0 0.0
        %906 = vmatpush.msra.mxu0 0.0
        %907 = vmatpush.msra.mxu0 0.0
        %908 = vmatpush.msra.mxu0 0.0
        %909 = vmatpush.msra.mxu0 0.0
        %910 = vmatpush.msra.mxu0 0.0
        %911 = vmatpush.msra.mxu0 0.0
        %912 = vmatpush.msra.mxu0 0.0
        %913 = vmatpush.msra.mxu0 0.0
        %914 = vmatpush.msra.mxu0 %v891
        %915 = vmatpush.msra.mxu0 %v890
        %916 = vmatmul.f32.gmra.mxu0 %v895
        %v917 = vpop.f32.mrf.mxu0
        %v918 = vadd.f32 0.0, %v917
        %919 = vmatmul.f32.gmra.mxu0 %v898
        %v920 = vpop.f32.mrf.mxu0
        %v921 = vadd.f32 0.0, %v920
        %922 = vdwg.mxu0
        %v923 = vsub.f32 0.0, %v918
        %v924 = vsub.f32 0.0, %v921
        %v925 = vmul.f32 %v923, 1.442695
        %v926 = vpow.pop %v925
        %v927 = vmul.f32 %v924, 1.442695
        %v928 = vpow.pop %v927
        %v929 = vadd.f32 %v926, 1.0
        %v930 = vadd.f32 %v928, 1.0
        %v931 = vrcp.pop %v929
        %v932 = vmul.f32 %v929, %v931
        %v933 = vsub.f32 1.0, %v932
        %v934 = vmul.f32 %v931, %v933
        %v935 = vadd.f32 %v931, %v934
        %vm936 = vweird.f32 %v929
        %vm937 = vweird.f32 %v931
        %vm938 = vmor %vm936, %vm937
        %v939 = vsel %vm938, %v931, %v935
        %v940 = vand.u32 2147483647, %v929
        %vm941 = vcmp.eq.f32.partialorder %v940, 8.507059e+37
        %v942 = vand.u32 %v929, 2147483648
        %v943 = vor.u32 1.1754944e-38, %v942
        %v944 = vsel %vm941, %v943, %v939
        %v945 = vmul.f32 1.0, %v944
        %v946 = vrcp.pop %v930
        %v947 = vmul.f32 %v930, %v946
        %v948 = vsub.f32 1.0, %v947
        %v949 = vmul.f32 %v946, %v948
        %v950 = vadd.f32 %v946, %v949
        %vm951 = vweird.f32 %v930
        %vm952 = vweird.f32 %v946
        %vm953 = vmor %vm951, %vm952
        %v954 = vsel %vm953, %v946, %v950
        %v955 = vand.u32 2147483647, %v930
        %vm956 = vcmp.eq.f32.partialorder %v955, 8.507059e+37
        %v957 = vand.u32 %v930, 2147483648
        %v958 = vor.u32 1.1754944e-38, %v957
        %v959 = vsel %vm956, %v958, %v954
        %v960 = vmul.f32 1.0, %v959
        %v961 = vld [vmem:[%s386] sm:$0xff]
        %963 = vst [vmem:[#allocation1] ss:$2 sm:$0xff] %v961
        %v964 = vld.sshfl [vmem:[#allocation1] sm:$0xff pattern:$0x75316420]
        %v965 = vld.sshfl [vmem:[#allocation1 + $0x8] sm:$0xff pattern:$0x75316420]
        %v966 = vsel %vm455, %v964, 0
        %v968 = vsel %vm455, %v965, 0
        %970 = vmatpush.msra.mxu0 0.0
        %971 = vmatpush.msra.mxu0 0.0
        %972 = vmatpush.msra.mxu0 0.0
        %973 = vmatpush.msra.mxu0 0.0
        %974 = vmatpush.msra.mxu0 0.0
        %975 = vmatpush.msra.mxu0 0.0
        %976 = vmatpush.msra.mxu0 0.0
        %977 = vmatpush.msra.mxu0 0.0
        %978 = vmatpush.msra.mxu0 0.0
        %979 = vmatpush.msra.mxu0 0.0
        %980 = vmatpush.msra.mxu0 0.0
        %981 = vmatpush.msra.mxu0 0.0
        %982 = vmatpush.msra.mxu0 0.0
        %983 = vmatpush.msra.mxu0 0.0
        %984 = vmatpush.msra.mxu0 0.0
        %985 = vmatpush.msra.mxu0 %v966
        %986 = vmatmul.f32.gmra.mxu0 %v555
        %v987 = vpop.f32.mrf.mxu0
        %v988 = vadd.f32 %v514, %v987
        %989 = vmatmul.f32.gmra.mxu0 %v558
        %v990 = vpop.f32.mrf.mxu0
        %v991 = vadd.f32 %v519, %v990
        %992 = vdwg.mxu0
        %993 = vmatpush.msra.mxu0 0.0
        %994 = vmatpush.msra.mxu0 0.0
        %995 = vmatpush.msra.mxu0 0.0
        %996 = vmatpush.msra.mxu0 0.0
        %997 = vmatpush.msra.mxu0 0.0
        %998 = vmatpush.msra.mxu0 0.0
        %999 = vmatpush.msra.mxu0 0.0
        %1000 = vmatpush.msra.mxu0 0.0
        %1001 = vmatpush.msra.mxu0 0.0
        %1002 = vmatpush.msra.mxu0 0.0
        %1003 = vmatpush.msra.mxu0 0.0
        %1004 = vmatpush.msra.mxu0 0.0
        %1005 = vmatpush.msra.mxu0 0.0
        %1006 = vmatpush.msra.mxu0 0.0
        %1007 = vmatpush.msra.mxu0 0.0
        %1008 = vmatpush.msra.mxu0 %v968
        %1009 = vmatmul.f32.gmra.mxu0 %v555
        %v1010 = vpop.f32.mrf.mxu0
        %v1011 = vadd.f32 %v514, %v1010
        %1012 = vmatmul.f32.gmra.mxu0 %v558
        %v1013 = vpop.f32.mrf.mxu0
        %v1014 = vadd.f32 %v519, %v1013
        %1015 = vdwg.mxu0
        %v1016 = vadd.f32 %v988, %v638
        %v1017 = vadd.f32 %v1011, %v638
        %v1018 = vadd.f32 %v991, %v643
        %v1019 = vadd.f32 %v1014, %v643
        %s1020 = scalar_lea.vmem %s386, 8
        %v1021 = vld [vmem:[%s1020] sm:$0xff]
        %1023 = vst [vmem:[#allocation1] ss:$2 sm:$0xff] %v1021
        %v1024 = vld.sshfl [vmem:[#allocation1] sm:$0xff pattern:$0x75316420]
        %v1025 = vld.sshfl [vmem:[#allocation1 + $0x8] sm:$0xff pattern:$0x75316420]
        %v1026 = vsel %vm455, %v1024, 0
        %v1028 = vsel %vm455, %v1025, 0
        %1030 = vmatpush.msra.mxu0 0.0
        %1031 = vmatpush.msra.mxu0 0.0
        %1032 = vmatpush.msra.mxu0 0.0
        %1033 = vmatpush.msra.mxu0 0.0
        %1034 = vmatpush.msra.mxu0 0.0
        %1035 = vmatpush.msra.mxu0 0.0
        %1036 = vmatpush.msra.mxu0 0.0
        %1037 = vmatpush.msra.mxu0 0.0
        %1038 = vmatpush.msra.mxu0 0.0
        %1039 = vmatpush.msra.mxu0 0.0
        %1040 = vmatpush.msra.mxu0 0.0
        %1041 = vmatpush.msra.mxu0 0.0
        %1042 = vmatpush.msra.mxu0 0.0
        %1043 = vmatpush.msra.mxu0 0.0
        %1044 = vmatpush.msra.mxu0 0.0
        %1045 = vmatpush.msra.mxu0 %v1026
        %1046 = vmatmul.f32.gmra.mxu0 %v555
        %v1047 = vpop.f32.mrf.mxu0
        %v1048 = vadd.f32 %v514, %v1047
        %1049 = vmatmul.f32.gmra.mxu0 %v558
        %v1050 = vpop.f32.mrf.mxu0
        %v1051 = vadd.f32 %v519, %v1050
        %1052 = vdwg.mxu0
        %1053 = vmatpush.msra.mxu0 0.0
        %1054 = vmatpush.msra.mxu0 0.0
        %1055 = vmatpush.msra.mxu0 0.0
        %1056 = vmatpush.msra.mxu0 0.0
        %1057 = vmatpush.msra.mxu0 0.0
        %1058 = vmatpush.msra.mxu0 0.0
        %1059 = vmatpush.msra.mxu0 0.0
        %1060 = vmatpush.msra.mxu0 0.0
        %1061 = vmatpush.msra.mxu0 0.0
        %1062 = vmatpush.msra.mxu0 0.0
        %1063 = vmatpush.msra.mxu0 0.0
        %1064 = vmatpush.msra.mxu0 0.0
        %1065 = vmatpush.msra.mxu0 0.0
        %1066 = vmatpush.msra.mxu0 0.0
        %1067 = vmatpush.msra.mxu0 0.0
        %1068 = vmatpush.msra.mxu0 %v1028
        %1069 = vmatmul.f32.gmra.mxu0 %v555
        %v1070 = vpop.f32.mrf.mxu0
        %v1071 = vadd.f32 %v514, %v1070
        %1072 = vmatmul.f32.gmra.mxu0 %v558
        %v1073 = vpop.f32.mrf.mxu0
        %v1074 = vadd.f32 %v519, %v1073
        %1075 = vdwg.mxu0
        %v1076 = vadd.f32 %v1048, %v638
        %v1077 = vadd.f32 %v1071, %v638
        %v1078 = vadd.f32 %v1051, %v643
        %v1079 = vadd.f32 %v1074, %v643
        %v1080 = vmul.f32 %v1016, %v847
        %v1081 = vmul.f32 %v1017, %v847
        %v1082 = vmul.f32 %v1018, %v852
        %v1083 = vmul.f32 %v1019, %v852
        %v1084 = vmul.f32 %v1076, %v861
        %v1085 = vmul.f32 %v1077, %v861
        %v1086 = vmul.f32 %v1078, %v866
        %v1087 = vmul.f32 %v1079, %v866
        %v1088 = vadd.f32 %v1080, %v1084
        %v1089 = vadd.f32 %v1081, %v1085
        %v1090 = vadd.f32 %v1082, %v1086
        %v1091 = vadd.f32 %v1083, %v1087
        %1093 = vset.pattern.permute.xlu0 0
        %1094 = vperm.xlu0 %1093, %v945
        %v1095 = vpop.permute.xlu0 %1094
        %1098 = vset.pattern.permute.xlu0 0
        %1099 = vperm.xlu0 %1098, %v960
        %v1100 = vpop.permute.xlu0 %1099
        %v1102 = vmul.f32 %v1088, %v1095
        %v1103 = vmul.f32 %v1089, %v1095
        %v1104 = vmul.f32 %v1090, %v1100
        %v1105 = vmul.f32 %v1091, %v1100
        %1106 = vst [vmem:[%s391] sm:$0xff] %v1102
        %1107 = vst [vmem:[%s391 + $0x8] sm:$0xff] %v1103
        %1108 = vst [vmem:[%s391 + $0x10] sm:$0xff] %v1104
        %1109 = vst [vmem:[%s391 + $0x18] sm:$0xff] %v1105
        %s1110 = scalar_lea.vmem %s386, 16
        %v1111 = vld [vmem:[%s1110] sm:$0xff]
        %1113 = vst [vmem:[#allocation1] ss:$2 sm:$0xff] %v1111
        %v1114 = vld.sshfl [vmem:[#allocation1] sm:$0xff pattern:$0x75316420]
        %v1115 = vld.sshfl [vmem:[#allocation1 + $0x8] sm:$0xff pattern:$0x75316420]
        %v1116 = vsel %vm455, %v1114, 0
        %v1118 = vsel %vm455, %v1115, 0
        %1120 = vmatpush.msra.mxu0 0.0
        %1121 = vmatpush.msra.mxu0 0.0
        %1122 = vmatpush.msra.mxu0 0.0
        %1123 = vmatpush.msra.mxu0 0.0
        %1124 = vmatpush.msra.mxu0 0.0
        %1125 = vmatpush.msra.mxu0 0.0
        %1126 = vmatpush.msra.mxu0 0.0
        %1127 = vmatpush.msra.mxu0 0.0
        %1128 = vmatpush.msra.mxu0 0.0
        %1129 = vmatpush.msra.mxu0 0.0
        %1130 = vmatpush.msra.mxu0 0.0
        %1131 = vmatpush.msra.mxu0 0.0
        %1132 = vmatpush.msra.mxu0 0.0
        %1133 = vmatpush.msra.mxu0 0.0
        %1134 = vmatpush.msra.mxu0 0.0
        %1135 = vmatpush.msra.mxu0 %v1116
        %1136 = vmatmul.f32.gmra.mxu0 %v555
        %v1137 = vpop.f32.mrf.mxu0
        %v1138 = vadd.f32 %v514, %v1137
        %1139 = vmatmul.f32.gmra.mxu0 %v558
        %v1140 = vpop.f32.mrf.mxu0
        %v1141 = vadd.f32 %v519, %v1140
        %1142 = vdwg.mxu0
        %1143 = vmatpush.msra.mxu0 0.0
        %1144 = vmatpush.msra.mxu0 0.0
        %1145 = vmatpush.msra.mxu0 0.0
        %1146 = vmatpush.msra.mxu0 0.0
        %1147 = vmatpush.msra.mxu0 0.0
        %1148 = vmatpush.msra.mxu0 0.0
        %1149 = vmatpush.msra.mxu0 0.0
        %1150 = vmatpush.msra.mxu0 0.0
        %1151 = vmatpush.msra.mxu0 0.0
        %1152 = vmatpush.msra.mxu0 0.0
        %1153 = vmatpush.msra.mxu0 0.0
        %1154 = vmatpush.msra.mxu0 0.0
        %1155 = vmatpush.msra.mxu0 0.0
        %1156 = vmatpush.msra.mxu0 0.0
        %1157 = vmatpush.msra.mxu0 0.0
        %1158 = vmatpush.msra.mxu0 %v1118
        %1159 = vmatmul.f32.gmra.mxu0 %v555
        %v1160 = vpop.f32.mrf.mxu0
        %v1161 = vadd.f32 %v514, %v1160
        %1162 = vmatmul.f32.gmra.mxu0 %v558
        %v1163 = vpop.f32.mrf.mxu0
        %v1164 = vadd.f32 %v519, %v1163
        %1165 = vdwg.mxu0
        %v1166 = vadd.f32 %v1138, %v638
        %v1167 = vadd.f32 %v1161, %v638
        %v1168 = vadd.f32 %v1141, %v643
        %v1169 = vadd.f32 %v1164, %v643
        %v1170 = vmul.f32 %v1076, %v847
        %v1171 = vmul.f32 %v1077, %v847
        %v1172 = vmul.f32 %v1078, %v852
        %v1173 = vmul.f32 %v1079, %v852
        %v1174 = vmul.f32 %v1016, %v835
        %v1175 = vmul.f32 %v1017, %v835
        %v1176 = vmul.f32 %v1018, %v840
        %v1177 = vmul.f32 %v1019, %v840
        %v1178 = vadd.f32 %v1170, %v1174
        %v1179 = vadd.f32 %v1171, %v1175
        %v1180 = vadd.f32 %v1172, %v1176
        %v1181 = vadd.f32 %v1173, %v1177
        %v1182 = vmul.f32 %v1166, %v861
        %v1183 = vmul.f32 %v1167, %v861
        %v1184 = vmul.f32 %v1168, %v866
        %v1185 = vmul.f32 %v1169, %v866
        %v1186 = vadd.f32 %v1178, %v1182
        %v1187 = vadd.f32 %v1179, %v1183
        %v1188 = vadd.f32 %v1180, %v1184
        %v1189 = vadd.f32 %v1181, %v1185
        %1190 = vset.pattern.permute.xlu0 1
        %1191 = vperm.xlu0 %1190, %v945
        %v1192 = vpop.permute.xlu0 %1191
        %1194 = vset.pattern.permute.xlu0 1
        %1195 = vperm.xlu0 %1194, %v960
        %v1196 = vpop.permute.xlu0 %1195
        %v1198 = vmul.f32 %v1186, %v1192
        %v1199 = vmul.f32 %v1187, %v1192
        %v1200 = vmul.f32 %v1188, %v1196
        %v1201 = vmul.f32 %v1189, %v1196
        %s1202 = scalar_lea.vmem %s391, 32
        %1203 = vst [vmem:[%s1202] sm:$0xff] %v1198
        %1204 = vst [vmem:[%s1202 + $0x8] sm:$0xff] %v1199
        %1205 = vst [vmem:[%s1202 + $0x10] sm:$0xff] %v1200
        %1206 = vst [vmem:[%s1202 + $0x18] sm:$0xff] %v1201
        %s1207 = scalar_lea.vmem %s386, 24
        %v1208 = vld [vmem:[%s1207] sm:$0xff]
        %1210 = vst [vmem:[#allocation1] ss:$2 sm:$0xff] %v1208
        %v1211 = vld.sshfl [vmem:[#allocation1] sm:$0xff pattern:$0x75316420]
        %v1212 = vld.sshfl [vmem:[#allocation1 + $0x8] sm:$0xff pattern:$0x75316420]
        %v1213 = vsel %vm455, %v1211, 0
        %v1215 = vsel %vm455, %v1212, 0
        %1217 = vmatpush.msra.mxu0 0.0
        %1218 = vmatpush.msra.mxu0 0.0
        %1219 = vmatpush.msra.mxu0 0.0
        %1220 = vmatpush.msra.mxu0 0.0
        %1221 = vmatpush.msra.mxu0 0.0
        %1222 = vmatpush.msra.mxu0 0.0
        %1223 = vmatpush.msra.mxu0 0.0
        %1224 = vmatpush.msra.mxu0 0.0
        %1225 = vmatpush.msra.mxu0 0.0
        %1226 = vmatpush.msra.mxu0 0.0
        %1227 = vmatpush.msra.mxu0 0.0
        %1228 = vmatpush.msra.mxu0 0.0
        %1229 = vmatpush.msra.mxu0 0.0
        %1230 = vmatpush.msra.mxu0 0.0
        %1231 = vmatpush.msra.mxu0 0.0
        %1232 = vmatpush.msra.mxu0 %v1213
        %1233 = vmatmul.f32.gmra.mxu0 %v555
        %v1234 = vpop.f32.mrf.mxu0
        %v1235 = vadd.f32 %v514, %v1234
        %1236 = vmatmul.f32.gmra.mxu0 %v558
        %v1237 = vpop.f32.mrf.mxu0
        %v1238 = vadd.f32 %v519, %v1237
        %1239 = vdwg.mxu0
        %1240 = vmatpush.msra.mxu0 0.0
        %1241 = vmatpush.msra.mxu0 0.0
        %1242 = vmatpush.msra.mxu0 0.0
        %1243 = vmatpush.msra.mxu0 0.0
        %1244 = vmatpush.msra.mxu0 0.0
        %1245 = vmatpush.msra.mxu0 0.0
        %1246 = vmatpush.msra.mxu0 0.0
        %1247 = vmatpush.msra.mxu0 0.0
        %1248 = vmatpush.msra.mxu0 0.0
        %1249 = vmatpush.msra.mxu0 0.0
        %1250 = vmatpush.msra.mxu0 0.0
        %1251 = vmatpush.msra.mxu0 0.0
        %1252 = vmatpush.msra.mxu0 0.0
        %1253 = vmatpush.msra.mxu0 0.0
        %1254 = vmatpush.msra.mxu0 0.0
        %1255 = vmatpush.msra.mxu0 %v1215
        %1256 = vmatmul.f32.gmra.mxu0 %v555
        %v1257 = vpop.f32.mrf.mxu0
        %v1258 = vadd.f32 %v514, %v1257
        %1259 = vmatmul.f32.gmra.mxu0 %v558
        %v1260 = vpop.f32.mrf.mxu0
        %v1261 = vadd.f32 %v519, %v1260
        %1262 = vdwg.mxu0
        %v1263 = vadd.f32 %v1235, %v638
        %v1264 = vadd.f32 %v1258, %v638
        %v1265 = vadd.f32 %v1238, %v643
        %v1266 = vadd.f32 %v1261, %v643
        %v1267 = vmul.f32 %v1166, %v847
        %v1268 = vmul.f32 %v1167, %v847
        %v1269 = vmul.f32 %v1168, %v852
        %v1270 = vmul.f32 %v1169, %v852
        %v1271 = vmul.f32 %v1076, %v835
        %v1272 = vmul.f32 %v1077, %v835
        %v1273 = vmul.f32 %v1078, %v840
        %v1274 = vmul.f32 %v1079, %v840
        %v1275 = vadd.f32 %v1267, %v1271
        %v1276 = vadd.f32 %v1268, %v1272
        %v1277 = vadd.f32 %v1269, %v1273
        %v1278 = vadd.f32 %v1270, %v1274
        %v1279 = vmul.f32 %v1263, %v861
        %v1280 = vmul.f32 %v1264, %v861
        %v1281 = vmul.f32 %v1265, %v866
        %v1282 = vmul.f32 %v1266, %v866
        %v1283 = vadd.f32 %v1275, %v1279
        %v1284 = vadd.f32 %v1276, %v1280
        %v1285 = vadd.f32 %v1277, %v1281
        %v1286 = vadd.f32 %v1278, %v1282
        %1287 = vset.pattern.permute.xlu0 2
        %1288 = vperm.xlu0 %1287, %v945
        %v1289 = vpop.permute.xlu0 %1288
        %1291 = vset.pattern.permute.xlu0 2
        %1292 = vperm.xlu0 %1291, %v960
        %v1293 = vpop.permute.xlu0 %1292
        %v1295 = vmul.f32 %v1283, %v1289
        %v1296 = vmul.f32 %v1284, %v1289
        %v1297 = vmul.f32 %v1285, %v1293
        %v1298 = vmul.f32 %v1286, %v1293
        %s1299 = scalar_lea.vmem %s391, 64
        %1300 = vst [vmem:[%s1299] sm:$0xff] %v1295
        %1301 = vst [vmem:[%s1299 + $0x8] sm:$0xff] %v1296
        %1302 = vst [vmem:[%s1299 + $0x10] sm:$0xff] %v1297
        %1303 = vst [vmem:[%s1299 + $0x18] sm:$0xff] %v1298
        %s1304 = scalar_lea.vmem %s386, 32
        %v1305 = vld [vmem:[%s1304] sm:$0xff]
        %1307 = vst [vmem:[#allocation1] ss:$2 sm:$0xff] %v1305
        %v1308 = vld.sshfl [vmem:[#allocation1] sm:$0xff pattern:$0x75316420]
        %v1309 = vld.sshfl [vmem:[#allocation1 + $0x8] sm:$0xff pattern:$0x75316420]
        %v1310 = vsel %vm455, %v1308, 0
        %v1312 = vsel %vm455, %v1309, 0
        %1314 = vmatpush.msra.mxu0 0.0
        %1315 = vmatpush.msra.mxu0 0.0
        %1316 = vmatpush.msra.mxu0 0.0
        %1317 = vmatpush.msra.mxu0 0.0
        %1318 = vmatpush.msra.mxu0 0.0
        %1319 = vmatpush.msra.mxu0 0.0
        %1320 = vmatpush.msra.mxu0 0.0
        %1321 = vmatpush.msra.mxu0 0.0
        %1322 = vmatpush.msra.mxu0 0.0
        %1323 = vmatpush.msra.mxu0 0.0
        %1324 = vmatpush.msra.mxu0 0.0
        %1325 = vmatpush.msra.mxu0 0.0
        %1326 = vmatpush.msra.mxu0 0.0
        %1327 = vmatpush.msra.mxu0 0.0
        %1328 = vmatpush.msra.mxu0 0.0
        %1329 = vmatpush.msra.mxu0 %v1310
        %1330 = vmatmul.f32.gmra.mxu0 %v555
        %v1331 = vpop.f32.mrf.mxu0
        %v1332 = vadd.f32 %v514, %v1331
        %1333 = vmatmul.f32.gmra.mxu0 %v558
        %v1334 = vpop.f32.mrf.mxu0
        %v1335 = vadd.f32 %v519, %v1334
        %1336 = vdwg.mxu0
        %1337 = vmatpush.msra.mxu0 0.0
        %1338 = vmatpush.msra.mxu0 0.0
        %1339 = vmatpush.msra.mxu0 0.0
        %1340 = vmatpush.msra.mxu0 0.0
        %1341 = vmatpush.msra.mxu0 0.0
        %1342 = vmatpush.msra.mxu0 0.0
        %1343 = vmatpush.msra.mxu0 0.0
        %1344 = vmatpush.msra.mxu0 0.0
        %1345 = vmatpush.msra.mxu0 0.0
        %1346 = vmatpush.msra.mxu0 0.0
        %1347 = vmatpush.msra.mxu0 0.0
        %1348 = vmatpush.msra.mxu0 0.0
        %1349 = vmatpush.msra.mxu0 0.0
        %1350 = vmatpush.msra.mxu0 0.0
        %1351 = vmatpush.msra.mxu0 0.0
        %1352 = vmatpush.msra.mxu0 %v1312
        %1353 = vmatmul.f32.gmra.mxu0 %v555
        %v1354 = vpop.f32.mrf.mxu0
        %v1355 = vadd.f32 %v514, %v1354
        %1356 = vmatmul.f32.gmra.mxu0 %v558
        %v1357 = vpop.f32.mrf.mxu0
        %v1358 = vadd.f32 %v519, %v1357
        %1359 = vdwg.mxu0
        %v1360 = vadd.f32 %v1332, %v638
        %v1361 = vadd.f32 %v1355, %v638
        %v1362 = vadd.f32 %v1335, %v643
        %v1363 = vadd.f32 %v1358, %v643
        %v1364 = vmul.f32 %v1263, %v847
        %v1365 = vmul.f32 %v1264, %v847
        %v1366 = vmul.f32 %v1265, %v852
        %v1367 = vmul.f32 %v1266, %v852
        %v1368 = vmul.f32 %v1166, %v835
        %v1369 = vmul.f32 %v1167, %v835
        %v1370 = vmul.f32 %v1168, %v840
        %v1371 = vmul.f32 %v1169, %v840
        %v1372 = vadd.f32 %v1364, %v1368
        %v1373 = vadd.f32 %v1365, %v1369
        %v1374 = vadd.f32 %v1366, %v1370
        %v1375 = vadd.f32 %v1367, %v1371
        %v1376 = vmul.f32 %v1360, %v861
        %v1377 = vmul.f32 %v1361, %v861
        %v1378 = vmul.f32 %v1362, %v866
        %v1379 = vmul.f32 %v1363, %v866
        %v1380 = vadd.f32 %v1372, %v1376
        %v1381 = vadd.f32 %v1373, %v1377
        %v1382 = vadd.f32 %v1374, %v1378
        %v1383 = vadd.f32 %v1375, %v1379
        %1384 = vset.pattern.permute.xlu0 3
        %1385 = vperm.xlu0 %1384, %v945
        %v1386 = vpop.permute.xlu0 %1385
        %1388 = vset.pattern.permute.xlu0 3
        %1389 = vperm.xlu0 %1388, %v960
        %v1390 = vpop.permute.xlu0 %1389
        %v1392 = vmul.f32 %v1380, %v1386
        %v1393 = vmul.f32 %v1381, %v1386
        %v1394 = vmul.f32 %v1382, %v1390
        %v1395 = vmul.f32 %v1383, %v1390
        %s1396 = scalar_lea.vmem %s391, 96
        %1397 = vst [vmem:[%s1396] sm:$0xff] %v1392
        %1398 = vst [vmem:[%s1396 + $0x8] sm:$0xff] %v1393
        %1399 = vst [vmem:[%s1396 + $0x10] sm:$0xff] %v1394
        %1400 = vst [vmem:[%s1396 + $0x18] sm:$0xff] %v1395
        %s1401 = scalar_lea.vmem %s386, 40
        %v1402 = vld [vmem:[%s1401] sm:$0xff]
        %1404 = vst [vmem:[#allocation1] ss:$2 sm:$0xff] %v1402
        %v1405 = vld.sshfl [vmem:[#allocation1] sm:$0xff pattern:$0x75316420]
        %v1406 = vld.sshfl [vmem:[#allocation1 + $0x8] sm:$0xff pattern:$0x75316420]
        %v1407 = vsel %vm455, %v1405, 0
        %v1409 = vsel %vm455, %v1406, 0
        %1411 = vmatpush.msra.mxu0 0.0
        %1412 = vmatpush.msra.mxu0 0.0
        %1413 = vmatpush.msra.mxu0 0.0
        %1414 = vmatpush.msra.mxu0 0.0
        %1415 = vmatpush.msra.mxu0 0.0
        %1416 = vmatpush.msra.mxu0 0.0
        %1417 = vmatpush.msra.mxu0 0.0
        %1418 = vmatpush.msra.mxu0 0.0
        %1419 = vmatpush.msra.mxu0 0.0
        %1420 = vmatpush.msra.mxu0 0.0
        %1421 = vmatpush.msra.mxu0 0.0
        %1422 = vmatpush.msra.mxu0 0.0
        %1423 = vmatpush.msra.mxu0 0.0
        %1424 = vmatpush.msra.mxu0 0.0
        %1425 = vmatpush.msra.mxu0 0.0
        %1426 = vmatpush.msra.mxu0 %v1407
        %1427 = vmatmul.f32.gmra.mxu0 %v555
        %v1428 = vpop.f32.mrf.mxu0
        %v1429 = vadd.f32 %v514, %v1428
        %1430 = vmatmul.f32.gmra.mxu0 %v558
        %v1431 = vpop.f32.mrf.mxu0
        %v1432 = vadd.f32 %v519, %v1431
        %1433 = vdwg.mxu0
        %1434 = vmatpush.msra.mxu0 0.0
        %1435 = vmatpush.msra.mxu0 0.0
        %1436 = vmatpush.msra.mxu0 0.0
        %1437 = vmatpush.msra.mxu0 0.0
        %1438 = vmatpush.msra.mxu0 0.0
        %1439 = vmatpush.msra.mxu0 0.0
        %1440 = vmatpush.msra.mxu0 0.0
        %1441 = vmatpush.msra.mxu0 0.0
        %1442 = vmatpush.msra.mxu0 0.0
        %1443 = vmatpush.msra.mxu0 0.0
        %1444 = vmatpush.msra.mxu0 0.0
        %1445 = vmatpush.msra.mxu0 0.0
        %1446 = vmatpush.msra.mxu0 0.0
        %1447 = vmatpush.msra.mxu0 0.0
        %1448 = vmatpush.msra.mxu0 0.0
        %1449 = vmatpush.msra.mxu0 %v1409
        %1450 = vmatmul.f32.gmra.mxu0 %v555
        %v1451 = vpop.f32.mrf.mxu0
        %v1452 = vadd.f32 %v514, %v1451
        %1453 = vmatmul.f32.gmra.mxu0 %v558
        %v1454 = vpop.f32.mrf.mxu0
        %v1455 = vadd.f32 %v519, %v1454
        %1456 = vdwg.mxu0
        %v1457 = vadd.f32 %v1429, %v638
        %v1458 = vadd.f32 %v1452, %v638
        %v1459 = vadd.f32 %v1432, %v643
        %v1460 = vadd.f32 %v1455, %v643
        %v1461 = vmul.f32 %v1360, %v847
        %v1462 = vmul.f32 %v1361, %v847
        %v1463 = vmul.f32 %v1362, %v852
        %v1464 = vmul.f32 %v1363, %v852
        %v1465 = vmul.f32 %v1263, %v835
        %v1466 = vmul.f32 %v1264, %v835
        %v1467 = vmul.f32 %v1265, %v840
        %v1468 = vmul.f32 %v1266, %v840
        %v1469 = vadd.f32 %v1461, %v1465
        %v1470 = vadd.f32 %v1462, %v1466
        %v1471 = vadd.f32 %v1463, %v1467
        %v1472 = vadd.f32 %v1464, %v1468
        %v1473 = vmul.f32 %v1457, %v861
        %v1474 = vmul.f32 %v1458, %v861
        %v1475 = vmul.f32 %v1459, %v866
        %v1476 = vmul.f32 %v1460, %v866
        %v1477 = vadd.f32 %v1469, %v1473
        %v1478 = vadd.f32 %v1470, %v1474
        %v1479 = vadd.f32 %v1471, %v1475
        %v1480 = vadd.f32 %v1472, %v1476
        %1481 = vset.pattern.permute.xlu0 4
        %1482 = vperm.xlu0 %1481, %v945
        %v1483 = vpop.permute.xlu0 %1482
        %1485 = vset.pattern.permute.xlu0 4
        %1486 = vperm.xlu0 %1485, %v960
        %v1487 = vpop.permute.xlu0 %1486
        %v1489 = vmul.f32 %v1477, %v1483
        %v1490 = vmul.f32 %v1478, %v1483
        %v1491 = vmul.f32 %v1479, %v1487
        %v1492 = vmul.f32 %v1480, %v1487
        %s1493 = scalar_lea.vmem %s391, 128
        %1494 = vst [vmem:[%s1493] sm:$0xff] %v1489
        %1495 = vst [vmem:[%s1493 + $0x8] sm:$0xff] %v1490
        %1496 = vst [vmem:[%s1493 + $0x10] sm:$0xff] %v1491
        %1497 = vst [vmem:[%s1493 + $0x18] sm:$0xff] %v1492
        %s1498 = scalar_lea.vmem %s386, 48
        %v1499 = vld [vmem:[%s1498] sm:$0xff]
        %1501 = vst [vmem:[#allocation1] ss:$2 sm:$0xff] %v1499
        %v1502 = vld.sshfl [vmem:[#allocation1] sm:$0xff pattern:$0x75316420]
        %v1503 = vld.sshfl [vmem:[#allocation1 + $0x8] sm:$0xff pattern:$0x75316420]
        %v1504 = vsel %vm455, %v1502, 0
        %v1506 = vsel %vm455, %v1503, 0
        %1508 = vmatpush.msra.mxu0 0.0
        %1509 = vmatpush.msra.mxu0 0.0
        %1510 = vmatpush.msra.mxu0 0.0
        %1511 = vmatpush.msra.mxu0 0.0
        %1512 = vmatpush.msra.mxu0 0.0
        %1513 = vmatpush.msra.mxu0 0.0
        %1514 = vmatpush.msra.mxu0 0.0
        %1515 = vmatpush.msra.mxu0 0.0
        %1516 = vmatpush.msra.mxu0 0.0
        %1517 = vmatpush.msra.mxu0 0.0
        %1518 = vmatpush.msra.mxu0 0.0
        %1519 = vmatpush.msra.mxu0 0.0
        %1520 = vmatpush.msra.mxu0 0.0
        %1521 = vmatpush.msra.mxu0 0.0
        %1522 = vmatpush.msra.mxu0 0.0
        %1523 = vmatpush.msra.mxu0 %v1504
        %1524 = vmatmul.f32.gmra.mxu0 %v555
        %v1525 = vpop.f32.mrf.mxu0
        %v1526 = vadd.f32 %v514, %v1525
        %1527 = vmatmul.f32.gmra.mxu0 %v558
        %v1528 = vpop.f32.mrf.mxu0
        %v1529 = vadd.f32 %v519, %v1528
        %1530 = vdwg.mxu0
        %1531 = vmatpush.msra.mxu0 0.0
        %1532 = vmatpush.msra.mxu0 0.0
        %1533 = vmatpush.msra.mxu0 0.0
        %1534 = vmatpush.msra.mxu0 0.0
        %1535 = vmatpush.msra.mxu0 0.0
        %1536 = vmatpush.msra.mxu0 0.0
        %1537 = vmatpush.msra.mxu0 0.0
        %1538 = vmatpush.msra.mxu0 0.0
        %1539 = vmatpush.msra.mxu0 0.0
        %1540 = vmatpush.msra.mxu0 0.0
        %1541 = vmatpush.msra.mxu0 0.0
        %1542 = vmatpush.msra.mxu0 0.0
        %1543 = vmatpush.msra.mxu0 0.0
        %1544 = vmatpush.msra.mxu0 0.0
        %1545 = vmatpush.msra.mxu0 0.0
        %1546 = vmatpush.msra.mxu0 %v1506
        %1547 = vmatmul.f32.gmra.mxu0 %v555
        %v1548 = vpop.f32.mrf.mxu0
        %v1549 = vadd.f32 %v514, %v1548
        %1550 = vmatmul.f32.gmra.mxu0 %v558
        %v1551 = vpop.f32.mrf.mxu0
        %v1552 = vadd.f32 %v519, %v1551
        %1553 = vdwg.mxu0
        %v1554 = vadd.f32 %v1526, %v638
        %v1555 = vadd.f32 %v1549, %v638
        %v1556 = vadd.f32 %v1529, %v643
        %v1557 = vadd.f32 %v1552, %v643
        %v1558 = vmul.f32 %v1457, %v847
        %v1559 = vmul.f32 %v1458, %v847
        %v1560 = vmul.f32 %v1459, %v852
        %v1561 = vmul.f32 %v1460, %v852
        %v1562 = vmul.f32 %v1360, %v835
        %v1563 = vmul.f32 %v1361, %v835
        %v1564 = vmul.f32 %v1362, %v840
        %v1565 = vmul.f32 %v1363, %v840
        %v1566 = vadd.f32 %v1558, %v1562
        %v1567 = vadd.f32 %v1559, %v1563
        %v1568 = vadd.f32 %v1560, %v1564
        %v1569 = vadd.f32 %v1561, %v1565
        %v1570 = vmul.f32 %v1554, %v861
        %v1571 = vmul.f32 %v1555, %v861
        %v1572 = vmul.f32 %v1556, %v866
        %v1573 = vmul.f32 %v1557, %v866
        %v1574 = vadd.f32 %v1566, %v1570
        %v1575 = vadd.f32 %v1567, %v1571
        %v1576 = vadd.f32 %v1568, %v1572
        %v1577 = vadd.f32 %v1569, %v1573
        %1578 = vset.pattern.permute.xlu0 5
        %1579 = vperm.xlu0 %1578, %v945
        %v1580 = vpop.permute.xlu0 %1579
        %1582 = vset.pattern.permute.xlu0 5
        %1583 = vperm.xlu0 %1582, %v960
        %v1584 = vpop.permute.xlu0 %1583
        %v1586 = vmul.f32 %v1574, %v1580
        %v1587 = vmul.f32 %v1575, %v1580
        %v1588 = vmul.f32 %v1576, %v1584
        %v1589 = vmul.f32 %v1577, %v1584
        %s1590 = scalar_lea.vmem %s391, 160
        %1591 = vst [vmem:[%s1590] sm:$0xff] %v1586
        %1592 = vst [vmem:[%s1590 + $0x8] sm:$0xff] %v1587
        %1593 = vst [vmem:[%s1590 + $0x10] sm:$0xff] %v1588
        %1594 = vst [vmem:[%s1590 + $0x18] sm:$0xff] %v1589
        %s1595 = scalar_lea.vmem %s386, 56
        %v1596 = vld [vmem:[%s1595] sm:$0xff]
        %1598 = vst [vmem:[#allocation1] ss:$2 sm:$0xff] %v1596
        %v1599 = vld.sshfl [vmem:[#allocation1] sm:$0xff pattern:$0x75316420]
        %v1600 = vld.sshfl [vmem:[#allocation1 + $0x8] sm:$0xff pattern:$0x75316420]
        %v1601 = vsel %vm455, %v1599, 0
        %v1603 = vsel %vm455, %v1600, 0
        %1605 = vmatpush.msra.mxu0 0.0
        %1606 = vmatpush.msra.mxu0 0.0
        %1607 = vmatpush.msra.mxu0 0.0
        %1608 = vmatpush.msra.mxu0 0.0
        %1609 = vmatpush.msra.mxu0 0.0
        %1610 = vmatpush.msra.mxu0 0.0
        %1611 = vmatpush.msra.mxu0 0.0
        %1612 = vmatpush.msra.mxu0 0.0
        %1613 = vmatpush.msra.mxu0 0.0
        %1614 = vmatpush.msra.mxu0 0.0
        %1615 = vmatpush.msra.mxu0 0.0
        %1616 = vmatpush.msra.mxu0 0.0
        %1617 = vmatpush.msra.mxu0 0.0
        %1618 = vmatpush.msra.mxu0 0.0
        %1619 = vmatpush.msra.mxu0 0.0
        %1620 = vmatpush.msra.mxu0 %v1601
        %1621 = vmatmul.f32.gmra.mxu0 %v555
        %v1622 = vpop.f32.mrf.mxu0
        %v1623 = vadd.f32 %v514, %v1622
        %1624 = vmatmul.f32.gmra.mxu0 %v558
        %v1625 = vpop.f32.mrf.mxu0
        %v1626 = vadd.f32 %v519, %v1625
        %1627 = vdwg.mxu0
        %1628 = vmatpush.msra.mxu0 0.0
        %1629 = vmatpush.msra.mxu0 0.0
        %1630 = vmatpush.msra.mxu0 0.0
        %1631 = vmatpush.msra.mxu0 0.0
        %1632 = vmatpush.msra.mxu0 0.0
        %1633 = vmatpush.msra.mxu0 0.0
        %1634 = vmatpush.msra.mxu0 0.0
        %1635 = vmatpush.msra.mxu0 0.0
        %1636 = vmatpush.msra.mxu0 0.0
        %1637 = vmatpush.msra.mxu0 0.0
        %1638 = vmatpush.msra.mxu0 0.0
        %1639 = vmatpush.msra.mxu0 0.0
        %1640 = vmatpush.msra.mxu0 0.0
        %1641 = vmatpush.msra.mxu0 0.0
        %1642 = vmatpush.msra.mxu0 0.0
        %1643 = vmatpush.msra.mxu0 %v1603
        %1644 = vmatmul.f32.gmra.mxu0 %v555
        %v1645 = vpop.f32.mrf.mxu0
        %v1646 = vadd.f32 %v514, %v1645
        %1647 = vmatmul.f32.gmra.mxu0 %v558
        %v1648 = vpop.f32.mrf.mxu0
        %v1649 = vadd.f32 %v519, %v1648
        %1650 = vdwg.mxu0
        %v1651 = vadd.f32 %v1623, %v638
        %v1652 = vadd.f32 %v1646, %v638
        %v1653 = vadd.f32 %v1626, %v643
        %v1654 = vadd.f32 %v1649, %v643
        %v1655 = vmul.f32 %v1554, %v847
        %v1656 = vmul.f32 %v1555, %v847
        %v1657 = vmul.f32 %v1556, %v852
        %v1658 = vmul.f32 %v1557, %v852
        %v1659 = vmul.f32 %v1457, %v835
        %v1660 = vmul.f32 %v1458, %v835
        %v1661 = vmul.f32 %v1459, %v840
        %v1662 = vmul.f32 %v1460, %v840
        %v1663 = vadd.f32 %v1655, %v1659
        %v1664 = vadd.f32 %v1656, %v1660
        %v1665 = vadd.f32 %v1657, %v1661
        %v1666 = vadd.f32 %v1658, %v1662
        %v1667 = vmul.f32 %v1651, %v861
        %v1668 = vmul.f32 %v1652, %v861
        %v1669 = vmul.f32 %v1653, %v866
        %v1670 = vmul.f32 %v1654, %v866
        %v1671 = vadd.f32 %v1663, %v1667
        %v1672 = vadd.f32 %v1664, %v1668
        %v1673 = vadd.f32 %v1665, %v1669
        %v1674 = vadd.f32 %v1666, %v1670
        %1675 = vset.pattern.permute.xlu0 6
        %1676 = vperm.xlu0 %1675, %v945
        %v1677 = vpop.permute.xlu0 %1676
        %1679 = vset.pattern.permute.xlu0 6
        %1680 = vperm.xlu0 %1679, %v960
        %v1681 = vpop.permute.xlu0 %1680
        %v1683 = vmul.f32 %v1671, %v1677
        %v1684 = vmul.f32 %v1672, %v1677
        %v1685 = vmul.f32 %v1673, %v1681
        %v1686 = vmul.f32 %v1674, %v1681
        %s1687 = scalar_lea.vmem %s391, 192
        %1688 = vst [vmem:[%s1687] sm:$0xff] %v1683
        %1689 = vst [vmem:[%s1687 + $0x8] sm:$0xff] %v1684
        %1690 = vst [vmem:[%s1687 + $0x10] sm:$0xff] %v1685
        %1691 = vst [vmem:[%s1687 + $0x18] sm:$0xff] %v1686
        %v1692 = vmul.f32 %v1651, %v847
        %v1693 = vmul.f32 %v1652, %v847
        %v1694 = vmul.f32 %v1653, %v852
        %v1695 = vmul.f32 %v1654, %v852
        %v1696 = vmul.f32 %v1554, %v835
        %v1697 = vmul.f32 %v1555, %v835
        %v1698 = vmul.f32 %v1556, %v840
        %v1699 = vmul.f32 %v1557, %v840
        %v1700 = vadd.f32 %v1692, %v1696
        %v1701 = vadd.f32 %v1693, %v1697
        %v1702 = vadd.f32 %v1694, %v1698
        %v1703 = vadd.f32 %v1695, %v1699
        %1704 = vset.pattern.permute.xlu0 7
        %1705 = vperm.xlu0 %1704, %v945
        %v1706 = vpop.permute.xlu0 %1705
        %1708 = vset.pattern.permute.xlu0 7
        %1709 = vperm.xlu0 %1708, %v960
        %v1710 = vpop.permute.xlu0 %1709
        %v1712 = vmul.f32 %v1700, %v1706
        %v1713 = vmul.f32 %v1701, %v1706
        %v1714 = vmul.f32 %v1702, %v1710
        %v1715 = vmul.f32 %v1703, %v1710
        %s1716 = scalar_lea.vmem %s391, 224
        %1717 = vst [vmem:[%s1716] sm:$0xff] %v1712
        %1718 = vst [vmem:[%s1716 + $0x8] sm:$0xff] %v1713
        %1719 = vst [vmem:[%s1716 + $0x10] sm:$0xff] %v1714
        %1720 = vst [vmem:[%s1716 + $0x18] sm:$0xff] %v1715
        %p1721 = scmp.lt.s32.totalorder %s23, 1
        %s1722 = scalar_select %p1721, %s23, 1
        %s1723 = smul.addr %s1722, 32
        %s1724 = smul.addr %s1723, 8
        %s1725 = scalar_lea.vmem %s10, %s1724
        // Predicated region
        $region69: #{lamme_forward.1} parent=59 // pred_check
          %p1726 = pneg %p256
        $region70: #{lamme_forward.1} parent=59 // pred_check_branch
          %1728 = sbr.rel (%p1726) target = $region72
        $region71: #{lamme_forward.1} parent=59 // pred_region
          _
        $region72: #{lamme_forward.1} parent=59 // pred_fallthru
          _
      $region60: #{lamme_forward.1} parent=5 // pred_fallthru
        _
      %p1729 = scmp.le.s32.totalorder 2, %s18
      // Predicated region
      $region73: #{lamme_forward.1} parent=5 // pred_check
        %p1730 = pneg %p1729
      $region74: #{lamme_forward.1} parent=5 // pred_check_branch
        %1732 = sbr.rel (%p1730) target = $region76
      $region75: #{lamme_forward.1} parent=5 // pred_region
        %s1733 = ssub.s32 %s18, 2
        // Predicated region
        $region77: #{lamme_forward.1} parent=75 // pred_check
          %p1734 = pneg %p262
        $region78: #{lamme_forward.1} parent=75 // pred_check_branch
          %1736 = sbr.rel (%p1734) target = $region80
        $region79: #{lamme_forward.1} parent=75 // pred_region
          %p1737 = scmp.lt.s32.totalorder %s24, 1
          %s1738 = scalar_select %p1737, %s24, 1
          %s1739 = smul.addr %s1738, 32
          %s1740 = smul.addr %s1739, 8
          %s1741 = scalar_lea.vmem %s10, %s1740
        $region80: #{lamme_forward.1} parent=75 // pred_fallthru
          _
      $region76: #{lamme_forward.1} parent=5 // pred_fallthru
        _
    $region6: #{lamme_forward.1} parent=1 // loop_footer
      %s22 = sadd.s32 1, %s18
    $region7: #{lamme_forward.1} parent=1 // loop_footer_branch
      %17 = sbr.rel target = $region3
    $region8: #{lamme_forward.1} parent=1 // loop_exit
      _
    %1742 = vsyncpa [#allocation3], 1
    %s1743 = scalar_lea.sflag [#allocation3], 1
    %1744 = vsyncpa %s1743, 1
    %1745 = vsyncpa [#allocation5], 1

</llo_original>
